<compile_context>
chip_gen: v5e
topology: v5e:2x2
jax: 0.10.0
libtpu: 0.0.40
codegen_flags: <defaults>
</compile_context>

<pallas_src>
import functools
import math

import jax
import jax.numpy as jnp
from jax.experimental import pallas as pl
from jax.experimental.pallas import tpu as pltpu


# ----------------------------- VMEM budgeting -------------------------------

_SUBLANE = {4: 8, 2: 16, 1: 32}   # itemsize -> sublane tile


def _round_up(x, m):
    return (x + m - 1) // m * m


def _padded_block_bytes(shape, itemsize):
    """VMEM footprint of one block: last dim pads to 128 lanes, 2nd-last to the
    dtype's sublane tile; leading dims multiply."""
    s = list(shape)
    s[-1] = _round_up(s[-1], 128)
    s[-2] = _round_up(s[-2], _SUBLANE[itemsize])
    n = 1
    for d in s:
        n *= d
    return n * itemsize


def _vmem_need_bytes(N, H, D_out, rst_pad, tile):
    """Estimate of VMEM needed by the pipeline for one dst tile."""
    HD = H * D_out
    ft = _padded_block_bytes((N, HD), 2)                  # bf16, Buffered(1)
    el = _padded_block_bytes((H, N), 4)                   # f32,  Buffered(1)
    er = 2 * _padded_block_bytes((tile, H), 4)            # double-buffered
    adj = 2 * _padded_block_bytes((tile, N), 1)           # int8
    att = 2 * _padded_block_bytes((H, tile, N), 2)        # bf16 output blocks
    rst = 2 * _padded_block_bytes((tile, rst_pad), 4)
    scratch = _padded_block_bytes((tile, rst_pad), 4)
    temps = 3 * _padded_block_bytes((tile, N), 4)         # compiler softmax temps
    return ft + el + er + adj + att + rst + scratch + temps


def _pick_tile_dst(N, H, D_out, rst_pad, vmem_budget_bytes):
    """Largest dst tile that divides N, is a multiple of 32 (int8 sublane tiling)
    and fits the VMEM budget; prefer >=256 to fill the 256-wide v6e/v7x MXU."""
    for t in (512, 256, 128, 64, 32):
        if t <= N and N % t == 0 and \
                _vmem_need_bytes(N, H, D_out, rst_pad, t) <= vmem_budget_bytes:
            return t
    return N   # tiny / odd-sized graphs: single full-extent tile


# ------------------------------- Pallas kernel -------------------------------

def _gat_tile_kernel(ft_ref, el_ref, er_ref, adjt_ref, rst_ref, att_ref, rst_acc,
                     *, negative_slope, num_heads, d_out, rst_pad):
    """One grid step == one tile of destination nodes (all heads).

    ft_ref   : (N_src, H*D_out)     bf16  projected features (grid-invariant, Buffered(1))
    el_ref   : (H, N_src)           f32   <a_l, ft_u> per source node (grid-invariant)
    er_ref   : (TILE_DST, H)        f32   <a_r, ft_v> per destination node (this tile)
    adjt_ref : (TILE_DST, N_src)    int8  adj_t[v, u] != 0 iff edge u->v (this tile)
    rst_ref  : (TILE_DST, RST_PAD)  f32   aggregated output, 128-lane padded
    att_ref  : (H, TILE_DST, N_src) bf16  edge-softmax weights (0 where no edge)
    rst_acc  : (TILE_DST, RST_PAD)  f32   VMEM scratch for the packed output slab
    """
    edge_mask = adjt_ref[...] != 0                 # computed once, shared across heads

    hd = num_heads * d_out
    if rst_pad > hd:                               # zero the pad lanes (sliced off in wrapper)
        rst_acc[:, hd:] = jnp.zeros((rst_acc.shape[0], rst_pad - hd), jnp.float32)

    for h in range(num_heads):                     # static unroll; H is small
        el = el_ref[h:h + 1, :]                    # (1, N_src)
        er = er_ref[:, h:h + 1]                    # (TILE_DST, 1)
        e = er + el                                # (TILE_DST, N_src)
        e = jnp.where(e > 0.0, e, negative_slope * e)        # LeakyReLU
        em = jnp.where(edge_mask, e, -1e30)                  # mask non-edges
        m = jnp.max(em, axis=-1, keepdims=True)
        m = jnp.maximum(m, -1e29)                  # all-masked row -> exp underflows to 0
        p = jnp.exp(em - m)                        # exactly 0 where no edge
        denom = jnp.sum(p, axis=-1, keepdims=True)
        # Exact normalization (approx reciprocal was not accurate enough for att);
        # the where() also guards zero-in-degree rows (p is all-zero there anyway).
        inv = 1.0 / jnp.where(denom > 0.0, denom, 1.0)
        a = (p * inv).astype(jnp.bfloat16)         # bf16 att: half the HBM writeback
        att_ref[h] = a
        # Aggregation on the MXU: bf16 operands, f32 accumulation; write each head
        # into its lane slice of the scratch slab (short live ranges, no concat).
        rst_acc[:, h * d_out:(h + 1) * d_out] = jnp.dot(
            a, ft_ref[:, h * d_out:(h + 1) * d_out],
            preferred_element_type=jnp.float32)

    rst_ref[...] = rst_acc[...]                    # one dense 128-lane-aligned store


# --------------------------------- wrapper -----------------------------------

def gat_conv_forward(feat, fc_weight, attn_l, attn_r, adj,
                     negative_slope=0.2, tile_dst=None):
    """feat: (N, D_in); fc_weight: (H*D_out, D_in); attn_l/r: (1, H, D_out);
    adj: (N_src, N_dst) dense 0/1 adjacency (adj[u, v] = 1 iff edge u->v).
    Returns (rst (N, H, D_out) f32, att (H, N_dst, N_src) bf16)."""
    N, _ = feat.shape
    _, H, D_out = attn_l.shape
    HD = H * D_out
    rst_pad = _round_up(HD, 128)

    feat = feat.astype(jnp.float32)
    # fc for ALL heads at once (one MXU-friendly matmul), matches torch x @ W^T.
    ft = feat @ fc_weight.astype(jnp.float32).T                  # (N, H*D_out)
    ft_h = ft.reshape(N, H, D_out)                               # torch .view order

    # Per-node/head attention logits (tiny (N, H) tensors).
    el = jnp.sum(ft_h * attn_l.astype(jnp.float32), axis=-1)     # (N, H)
    er = jnp.sum(ft_h * attn_r.astype(jnp.float32), axis=-1)     # (N, H)

    ft_k = ft.astype(jnp.bfloat16)      # natural lane-packed layout; no HBM transpose
    el_k = el.T                         # (H, N) tiny transpose
    er_k = er                           # (N_dst, H)
    # int8 mask data: cast BEFORE the transpose so the N^2 transpose pass shrinks 4x.
    # TODO(synk): accept adjacency already stored as (N_dst, N_src) to remove it entirely.
    adj_t = adj.astype(jnp.int8).T      # (N_dst, N_src)

    try:
        vmem_phys = int(pltpu.get_tpu_info().vmem_capacity_bytes)
    except Exception:
        vmem_phys = 64 * 1024 * 1024    # v7x per-TC size; conservative fallback
    vmem_budget = int(vmem_phys * 0.75)

    if tile_dst is None:
        tile_dst = _pick_tile_dst(N, H, D_out, rst_pad, vmem_budget)
    assert N % tile_dst == 0, "tile_dst must divide N"
    assert tile_dst == N or tile_dst % 32 == 0, \
        "int8 adjacency tiling needs tile_dst to be a multiple of 32"
    n_tiles = N // tile_dst

    need = _vmem_need_bytes(N, H, D_out, rst_pad, tile_dst)
    vmem_limit = int(max(need + (4 << 20), 32 << 20))
    vmem_limit = int(min(vmem_limit, int(vmem_phys * 0.8)))

    kernel = functools.partial(_gat_tile_kernel, negative_slope=negative_slope,
                               num_heads=H, d_out=D_out, rst_pad=rst_pad)

    rst_padded, att = pl.pallas_call(
        kernel,
        out_shape=(jax.ShapeDtypeStruct((N, rst_pad), jnp.float32),
                   jax.ShapeDtypeStruct((H, N, N), jnp.bfloat16)),
        grid_spec=pltpu.PrefetchScalarGridSpec(
            num_scalar_prefetch=0,
            grid=(n_tiles,),
            in_specs=[
                # grid-invariant inputs: single-buffered (no useless second copy)
                pl.BlockSpec((N, HD), lambda i: (0, 0),
                             pipeline_mode=pl.Buffered(1)),        # ft (bf16, shared)
                pl.BlockSpec((H, N), lambda i: (0, 0),
                             pipeline_mode=pl.Buffered(1)),        # el (shared)
                pl.BlockSpec((tile_dst, H), lambda i: (i, 0)),     # er (dst tile)
                pl.BlockSpec((tile_dst, N), lambda i: (i, 0)),     # adj_t (int8, dst tile)
            ],
            out_specs=[
                pl.BlockSpec((tile_dst, rst_pad), lambda i: (i, 0)),  # rst (lane-padded)
                pl.BlockSpec((H, tile_dst, N), lambda i: (0, i, 0)),  # att (bf16)
            ],
            scratch_shapes=[pltpu.VMEM((tile_dst, rst_pad), jnp.float32)],
        ),
        compiler_params=pltpu.CompilerParams(
            dimension_semantics=("parallel",),
            vmem_limit_bytes=vmem_limit),
    )(ft_k, el_k, er_k, adj_t)

    rst = rst_padded[:, :HD].reshape(N, H, D_out)   # drop pad lanes; final DGL layout
    return rst, att


# ------------------------------ pure-JAX reference ---------------------------

def gat_ref(feat, fc_weight, attn_l, attn_r, adj, negative_slope=0.2):
    """Pure-JAX reference of the same dense-graph GATConv forward (f32 end to end)."""
    N = feat.shape[0]
    H, D_out = attn_l.shape[1], attn_l.shape[2]
    ft = (feat @ fc_weight.T).reshape(N, H, D_out)
    el = (ft * attn_l).sum(-1)                         # (N, H)
    er = (ft * attn_r).sum(-1)                         # (N, H)
    e = el[:, None, :] + er[None, :, :]                # (u, v, h)
    e = jnp.where(e > 0, e, negative_slope * e)
    mask = adj[:, :, None] > 0
    em = jnp.where(mask, e, -1e30)
    m = em.max(axis=0, keepdims=True)
    p = jnp.exp(em - m) * adj[:, :, None]
    a = p / p.sum(axis=0, keepdims=True)               # (u, v, h)
    rst = jnp.einsum('uvh,uhd->vhd', a, ft)            # (v, h, d)
    att = jnp.transpose(a, (2, 1, 0))                  # (h, v, u)
    return rst, att


if __name__ == "__main__":
    N, D_IN, D_OUT, H = 64, 32, 16, 4
    NEG_SLOPE = 0.2

    key = jax.random.PRNGKey(0)
    k_feat, k_w, k_al, k_ar, k_adj = jax.random.split(key, 5)

    feat = jax.random.normal(k_feat, (N, D_IN), dtype=jnp.float32)

    # xavier_normal_ with gain = calculate_gain('relu') = sqrt(2)
    gain = math.sqrt(2.0)
    std_w = gain * math.sqrt(2.0 / (D_IN + H * D_OUT))
    fc_weight = std_w * jax.random.normal(k_w, (H * D_OUT, D_IN), dtype=jnp.float32)
    std_a = gain * math.sqrt(2.0 / (H + D_OUT))
    attn_l = std_a * jax.random.normal(k_al, (1, H, D_OUT), dtype=jnp.float32)
    attn_r = std_a * jax.random.normal(k_ar, (1, H, D_OUT), dtype=jnp.float32)

    # Random dense graph + self-loops (guarantees no 0-in-degree nodes).
    adj = (jax.random.uniform(k_adj, (N, N)) < 0.3).astype(jnp.float32)
    adj = jnp.maximum(adj, jnp.eye(N, dtype=jnp.float32))   # adj[u, v] = 1 iff edge u->v

    # tile_dst=32 -> 2 destination tiles: exercises the tiled path at this small N.
    rst, att = gat_conv_forward(feat, fc_weight, attn_l, attn_r, adj,
                                negative_slope=NEG_SLOPE, tile_dst=32)
    rst = jax.block_until_ready(rst)
    att = jax.block_until_ready(att)

    rst_ref_v, att_ref_v = gat_ref(feat, fc_weight, attn_l, attn_r, adj, NEG_SLOPE)
    assert rst.shape == (N, H, D_OUT) and att.shape == (H, N, N)
    # rst aggregation uses bf16 MXU operands (f32 accumulation) -> bf16-rounding tolerance.
    assert jnp.max(jnp.abs(rst - rst_ref_v)) < 2e-2
    # att normalization is exact; only the bf16 storage rounding differs (<~1e-3 abs).
    assert jnp.max(jnp.abs(att.astype(jnp.float32) - att_ref_v)) < 5e-3

    print("KERNEL_OK")
</pallas_src>

<mosaic_0001>
module attributes {stable_mosaic.version = 11 : i64} {
  func.func @_gat_tile_kernel(%arg0: i32, %arg1: memref<64x64xbf16, #tpu.memory_space<vmem>>, %arg2: memref<4x64xf32, #tpu.memory_space<vmem>>, %arg3: memref<32x4xf32, #tpu.memory_space<vmem>>, %arg4: memref<32x64xi8, #tpu.memory_space<vmem>>, %arg5: memref<32x128xf32, #tpu.memory_space<vmem>>, %arg6: memref<4x32x64xbf16, #tpu.memory_space<vmem>>, %arg7: memref<32x128xf32, #tpu.memory_space<vmem>>) attributes {dimension_semantics = [#tpu.dimension_semantics<parallel>], iteration_bounds = array<i64: 2>, scalar_prefetch = 0 : i64, scratch_operands = 1 : i64, tpu.core_type = #tpu.core_type<tc>, window_params = [{pipeline_mode = #tpu.pipeline_mode<synchronous>, transform_indices = @transform_0, window_bounds = array<i64: 64, 64>}, {pipeline_mode = #tpu.pipeline_mode<synchronous>, transform_indices = @transform_1, window_bounds = array<i64: 4, 64>}, {transform_indices = @transform_2, window_bounds = array<i64: 32, 4>}, {transform_indices = @transform_3, window_bounds = array<i64: 32, 64>}, {transform_indices = @transform_4, window_bounds = array<i64: 32, 128>}, {transform_indices = @transform_5, window_bounds = array<i64: 4, 32, 64>}]} {
    %c0 = arith.constant 0 : index
    %c0_0 = arith.constant 0 : index
    %0 = vector.load %arg4[%c0, %c0_0] : memref<32x64xi8, #tpu.memory_space<vmem>>, vector<32x64xi8>
    %c0_i8 = arith.constant 0 : i8
    %1 = vector.broadcast %c0_i8 : i8 to vector<32x64xi8>
    %2 = arith.cmpi ne, %0, %1 : vector<32x64xi8>
    %cst = arith.constant 0.000000e+00 : f32
    %3 = vector.broadcast %cst : f32 to vector<32x64xf32>
    %c0_1 = arith.constant 0 : index
    %c64 = arith.constant 64 : index
    %4 = vector.load %arg7[%c0_1, %c64] : memref<32x128xf32, #tpu.memory_space<vmem>>, vector<32x64xf32>
    tpu.vector_store %arg7[%c0_1, %c64], %3 {strides = array<i32>} : memref<32x128xf32, #tpu.memory_space<vmem>>, vector<32x64xf32>,
    %c0_2 = arith.constant 0 : index
    %c0_3 = arith.constant 0 : index
    %5 = vector.load %arg2[%c0_2, %c0_3] : memref<4x64xf32, #tpu.memory_space<vmem>>, vector<1x64xf32>
    %c0_4 = arith.constant 0 : index
    %c0_5 = arith.constant 0 : index
    %6 = vector.load %arg3[%c0_4, %c0_5] : memref<32x4xf32, #tpu.memory_space<vmem>>, vector<32x1xf32>
    %7 = vector.broadcast %6 : vector<32x1xf32> to vector<32x64xf32>
    %8 = vector.broadcast %5 : vector<1x64xf32> to vector<32x64xf32>
    %9 = arith.addf %7, %8 : vector<32x64xf32>
    %cst_6 = arith.constant 0.000000e+00 : f32
    %10 = vector.broadcast %cst_6 : f32 to vector<32x64xf32>
    %11 = arith.cmpf ogt, %9, %10 : vector<32x64xf32>
    %cst_7 = arith.constant 2.000000e-01 : f32
    %12 = vector.broadcast %cst_7 : f32 to vector<32x64xf32>
    %13 = arith.mulf %12, %9 : vector<32x64xf32>
    %14 = arith.select %11, %9, %13 : vector<32x64xi1>, vector<32x64xf32>
    %cst_8 = arith.constant -1.000000e+30 : f32
    %15 = vector.broadcast %cst_8 : f32 to vector<32x64xf32>
    %16 = arith.select %2, %14, %15 : vector<32x64xi1>, vector<32x64xf32>
    %cst_9 = arith.constant dense<0xFF800000> : vector<32xf32>
    %17 = vector.multi_reduction <maximumf>, %16, %cst_9 [1] : vector<32x64xf32> to vector<32xf32>
    %18 = vector.shape_cast %17 : vector<32xf32> to vector<32x1xf32>
    %cst_10 = arith.constant -1.000000e+29 : f32
    %19 = vector.broadcast %cst_10 : f32 to vector<32x1xf32>
    %20 = arith.maximumf %18, %19 : vector<32x1xf32>
    %21 = vector.broadcast %20 : vector<32x1xf32> to vector<32x64xf32>
    %22 = arith.subf %16, %21 : vector<32x64xf32>
    %23 = math.exp %22 : vector<32x64xf32>
    %cst_11 = arith.constant dense<0.000000e+00> : vector<32xf32>
    %24 = vector.multi_reduction <add>, %23, %cst_11 [1] : vector<32x64xf32> to vector<32xf32>
    %25 = vector.shape_cast %24 : vector<32xf32> to vector<32x1xf32>
    %cst_12 = arith.constant 0.000000e+00 : f32
    %26 = vector.broadcast %cst_12 : f32 to vector<32x1xf32>
    %27 = arith.cmpf ogt, %25, %26 : vector<32x1xf32>
    %cst_13 = arith.constant 1.000000e+00 : f32
    %28 = vector.broadcast %cst_13 : f32 to vector<32x1xf32>
    %29 = arith.select %27, %25, %28 : vector<32x1xi1>, vector<32x1xf32>
    %cst_14 = arith.constant 1.000000e+00 : f32
    %30 = vector.broadcast %cst_14 : f32 to vector<32x1xf32>
    %31 = arith.divf %30, %29 : vector<32x1xf32>
    %32 = vector.broadcast %31 : vector<32x1xf32> to vector<32x64xf32>
    %33 = arith.mulf %23, %32 : vector<32x64xf32>
    %34 = arith.truncf %33 : vector<32x64xf32> to vector<32x64xbf16>
    %c0_15 = arith.constant 0 : index
    %c0_16 = arith.constant 0 : index
    %c0_17 = arith.constant 0 : index
    %35 = vector.load %arg6[%c0_15, %c0_16, %c0_17] : memref<4x32x64xbf16, #tpu.memory_space<vmem>>, vector<1x32x64xbf16>
    %36 = vector.shape_cast %35 : vector<1x32x64xbf16> to vector<32x64xbf16>
    %37 = vector.shape_cast %34 : vector<32x64xbf16> to vector<1x32x64xbf16>
    tpu.vector_store %arg6[%c0_15, %c0_16, %c0_17], %37 {strides = array<i32>} : memref<4x32x64xbf16, #tpu.memory_space<vmem>>, vector<1x32x64xbf16>,
    %c0_18 = arith.constant 0 : index
    %c0_19 = arith.constant 0 : index
    %38 = vector.load %arg1[%c0_18, %c0_19] : memref<64x64xbf16, #tpu.memory_space<vmem>>, vector<64x16xbf16>
    %cst_20 = arith.constant dense<0.000000e+00> : vector<32x16xf32>
    %39 = tpu.matmul %34, %38, %cst_20 {dimension_numbers = #tpu.dot_dimension_numbers<[1], [0], [0], [1], [0, 0, 1, 1], [], []>} : vector<32x64xbf16>, vector<64x16xbf16>, vector<32x16xf32> -> vector<32x16xf32>
    %c0_21 = arith.constant 0 : index
    %c0_22 = arith.constant 0 : index
    %40 = vector.load %arg7[%c0_21, %c0_22] : memref<32x128xf32, #tpu.memory_space<vmem>>, vector<32x16xf32>
    tpu.vector_store %arg7[%c0_21, %c0_22], %39 {strides = array<i32>} : memref<32x128xf32, #tpu.memory_space<vmem>>, vector<32x16xf32>,
    %c1 = arith.constant 1 : index
    %c0_23 = arith.constant 0 : index
    %41 = vector.load %arg2[%c1, %c0_23] : memref<4x64xf32, #tpu.memory_space<vmem>>, vector<1x64xf32>
    %c0_24 = arith.constant 0 : index
    %c1_25 = arith.constant 1 : index
    %42 = vector.load %arg3[%c0_24, %c1_25] : memref<32x4xf32, #tpu.memory_space<vmem>>, vector<32x1xf32>
    %43 = vector.broadcast %42 : vector<32x1xf32> to vector<32x64xf32>
    %44 = vector.broadcast %41 : vector<1x64xf32> to vector<32x64xf32>
    %45 = arith.addf %43, %44 : vector<32x64xf32>
    %cst_26 = arith.constant 0.000000e+00 : f32
    %46 = vector.broadcast %cst_26 : f32 to vector<32x64xf32>
    %47 = arith.cmpf ogt, %45, %46 : vector<32x64xf32>
    %cst_27 = arith.constant 2.000000e-01 : f32
    %48 = vector.broadcast %cst_27 : f32 to vector<32x64xf32>
    %49 = arith.mulf %48, %45 : vector<32x64xf32>
    %50 = arith.select %47, %45, %49 : vector<32x64xi1>, vector<32x64xf32>
    %cst_28 = arith.constant -1.000000e+30 : f32
    %51 = vector.broadcast %cst_28 : f32 to vector<32x64xf32>
    %52 = arith.select %2, %50, %51 : vector<32x64xi1>, vector<32x64xf32>
    %cst_29 = arith.constant dense<0xFF800000> : vector<32xf32>
    %53 = vector.multi_reduction <maximumf>, %52, %cst_29 [1] : vector<32x64xf32> to vector<32xf32>
    %54 = vector.shape_cast %53 : vector<32xf32> to vector<32x1xf32>
    %cst_30 = arith.constant -1.000000e+29 : f32
    %55 = vector.broadcast %cst_30 : f32 to vector<32x1xf32>
    %56 = arith.maximumf %54, %55 : vector<32x1xf32>
    %57 = vector.broadcast %56 : vector<32x1xf32> to vector<32x64xf32>
    %58 = arith.subf %52, %57 : vector<32x64xf32>
    %59 = math.exp %58 : vector<32x64xf32>
    %cst_31 = arith.constant dense<0.000000e+00> : vector<32xf32>
    %60 = vector.multi_reduction <add>, %59, %cst_31 [1] : vector<32x64xf32> to vector<32xf32>
    %61 = vector.shape_cast %60 : vector<32xf32> to vector<32x1xf32>
    %cst_32 = arith.constant 0.000000e+00 : f32
    %62 = vector.broadcast %cst_32 : f32 to vector<32x1xf32>
    %63 = arith.cmpf ogt, %61, %62 : vector<32x1xf32>
    %cst_33 = arith.constant 1.000000e+00 : f32
    %64 = vector.broadcast %cst_33 : f32 to vector<32x1xf32>
    %65 = arith.select %63, %61, %64 : vector<32x1xi1>, vector<32x1xf32>
    %cst_34 = arith.constant 1.000000e+00 : f32
    %66 = vector.broadcast %cst_34 : f32 to vector<32x1xf32>
    %67 = arith.divf %66, %65 : vector<32x1xf32>
    %68 = vector.broadcast %67 : vector<32x1xf32> to vector<32x64xf32>
    %69 = arith.mulf %59, %68 : vector<32x64xf32>
    %70 = arith.truncf %69 : vector<32x64xf32> to vector<32x64xbf16>
    %c1_35 = arith.constant 1 : index
    %c0_36 = arith.constant 0 : index
    %c0_37 = arith.constant 0 : index
    %71 = vector.load %arg6[%c1_35, %c0_36, %c0_37] : memref<4x32x64xbf16, #tpu.memory_space<vmem>>, vector<1x32x64xbf16>
    %72 = vector.shape_cast %71 : vector<1x32x64xbf16> to vector<32x64xbf16>
    %73 = vector.shape_cast %70 : vector<32x64xbf16> to vector<1x32x64xbf16>
    tpu.vector_store %arg6[%c1_35, %c0_36, %c0_37], %73 {strides = array<i32>} : memref<4x32x64xbf16, #tpu.memory_space<vmem>>, vector<1x32x64xbf16>,
    %c0_38 = arith.constant 0 : index
    %c16 = arith.constant 16 : index
    %74 = vector.load %arg1[%c0_38, %c16] : memref<64x64xbf16, #tpu.memory_space<vmem>>, vector<64x16xbf16>
    %cst_39 = arith.constant dense<0.000000e+00> : vector<32x16xf32>
    %75 = tpu.matmul %70, %74, %cst_39 {dimension_numbers = #tpu.dot_dimension_numbers<[1], [0], [0], [1], [0, 0, 1, 1], [], []>} : vector<32x64xbf16>, vector<64x16xbf16>, vector<32x16xf32> -> vector<32x16xf32>
    %c0_40 = arith.constant 0 : index
    %c16_41 = arith.constant 16 : index
    %76 = vector.load %arg7[%c0_40, %c16_41] : memref<32x128xf32, #tpu.memory_space<vmem>>, vector<32x16xf32>
    tpu.vector_store %arg7[%c0_40, %c16_41], %75 {strides = array<i32>} : memref<32x128xf32, #tpu.memory_space<vmem>>, vector<32x16xf32>,
    %c2 = arith.constant 2 : index
    %c0_42 = arith.constant 0 : index
    %77 = vector.load %arg2[%c2, %c0_42] : memref<4x64xf32, #tpu.memory_space<vmem>>, vector<1x64xf32>
    %c0_43 = arith.constant 0 : index
    %c2_44 = arith.constant 2 : index
    %78 = vector.load %arg3[%c0_43, %c2_44] : memref<32x4xf32, #tpu.memory_space<vmem>>, vector<32x1xf32>
    %79 = vector.broadcast %78 : vector<32x1xf32> to vector<32x64xf32>
    %80 = vector.broadcast %77 : vector<1x64xf32> to vector<32x64xf32>
    %81 = arith.addf %79, %80 : vector<32x64xf32>
    %cst_45 = arith.constant 0.000000e+00 : f32
    %82 = vector.broadcast %cst_45 : f32 to vector<32x64xf32>
    %83 = arith.cmpf ogt, %81, %82 : vector<32x64xf32>
    %cst_46 = arith.constant 2.000000e-01 : f32
    %84 = vector.broadcast %cst_46 : f32 to vector<32x64xf32>
    %85 = arith.mulf %84, %81 : vector<32x64xf32>
    %86 = arith.select %83, %81, %85 : vector<32x64xi1>, vector<32x64xf32>
    %cst_47 = arith.constant -1.000000e+30 : f32
    %87 = vector.broadcast %cst_47 : f32 to vector<32x64xf32>
    %88 = arith.select %2, %86, %87 : vector<32x64xi1>, vector<32x64xf32>
    %cst_48 = arith.constant dense<0xFF800000> : vector<32xf32>
    %89 = vector.multi_reduction <maximumf>, %88, %cst_48 [1] : vector<32x64xf32> to vector<32xf32>
    %90 = vector.shape_cast %89 : vector<32xf32> to vector<32x1xf32>
    %cst_49 = arith.constant -1.000000e+29 : f32
    %91 = vector.broadcast %cst_49 : f32 to vector<32x1xf32>
    %92 = arith.maximumf %90, %91 : vector<32x1xf32>
    %93 = vector.broadcast %92 : vector<32x1xf32> to vector<32x64xf32>
    %94 = arith.subf %88, %93 : vector<32x64xf32>
    %95 = math.exp %94 : vector<32x64xf32>
    %cst_50 = arith.constant dense<0.000000e+00> : vector<32xf32>
    %96 = vector.multi_reduction <add>, %95, %cst_50 [1] : vector<32x64xf32> to vector<32xf32>
    %97 = vector.shape_cast %96 : vector<32xf32> to vector<32x1xf32>
    %cst_51 = arith.constant 0.000000e+00 : f32
    %98 = vector.broadcast %cst_51 : f32 to vector<32x1xf32>
    %99 = arith.cmpf ogt, %97, %98 : vector<32x1xf32>
    %cst_52 = arith.constant 1.000000e+00 : f32
    %100 = vector.broadcast %cst_52 : f32 to vector<32x1xf32>
    %101 = arith.select %99, %97, %100 : vector<32x1xi1>, vector<32x1xf32>
    %cst_53 = arith.constant 1.000000e+00 : f32
    %102 = vector.broadcast %cst_53 : f32 to vector<32x1xf32>
    %103 = arith.divf %102, %101 : vector<32x1xf32>
    %104 = vector.broadcast %103 : vector<32x1xf32> to vector<32x64xf32>
    %105 = arith.mulf %95, %104 : vector<32x64xf32>
    %106 = arith.truncf %105 : vector<32x64xf32> to vector<32x64xbf16>
    %c2_54 = arith.constant 2 : index
    %c0_55 = arith.constant 0 : index
    %c0_56 = arith.constant 0 : index
    %107 = vector.load %arg6[%c2_54, %c0_55, %c0_56] : memref<4x32x64xbf16, #tpu.memory_space<vmem>>, vector<1x32x64xbf16>
    %108 = vector.shape_cast %107 : vector<1x32x64xbf16> to vector<32x64xbf16>
    %109 = vector.shape_cast %106 : vector<32x64xbf16> to vector<1x32x64xbf16>
    tpu.vector_store %arg6[%c2_54, %c0_55, %c0_56], %109 {strides = array<i32>} : memref<4x32x64xbf16, #tpu.memory_space<vmem>>, vector<1x32x64xbf16>,
    %c0_57 = arith.constant 0 : index
    %c32 = arith.constant 32 : index
    %110 = vector.load %arg1[%c0_57, %c32] : memref<64x64xbf16, #tpu.memory_space<vmem>>, vector<64x16xbf16>
    %cst_58 = arith.constant dense<0.000000e+00> : vector<32x16xf32>
    %111 = tpu.matmul %106, %110, %cst_58 {dimension_numbers = #tpu.dot_dimension_numbers<[1], [0], [0], [1], [0, 0, 1, 1], [], []>} : vector<32x64xbf16>, vector<64x16xbf16>, vector<32x16xf32> -> vector<32x16xf32>
    %c0_59 = arith.constant 0 : index
    %c32_60 = arith.constant 32 : index
    %112 = vector.load %arg7[%c0_59, %c32_60] : memref<32x128xf32, #tpu.memory_space<vmem>>, vector<32x16xf32>
    tpu.vector_store %arg7[%c0_59, %c32_60], %111 {strides = array<i32>} : memref<32x128xf32, #tpu.memory_space<vmem>>, vector<32x16xf32>,
    %c3 = arith.constant 3 : index
    %c0_61 = arith.constant 0 : index
    %113 = vector.load %arg2[%c3, %c0_61] : memref<4x64xf32, #tpu.memory_space<vmem>>, vector<1x64xf32>
    %c0_62 = arith.constant 0 : index
    %c3_63 = arith.constant 3 : index
    %114 = vector.load %arg3[%c0_62, %c3_63] : memref<32x4xf32, #tpu.memory_space<vmem>>, vector<32x1xf32>
    %115 = vector.broadcast %114 : vector<32x1xf32> to vector<32x64xf32>
    %116 = vector.broadcast %113 : vector<1x64xf32> to vector<32x64xf32>
    %117 = arith.addf %115, %116 : vector<32x64xf32>
    %cst_64 = arith.constant 0.000000e+00 : f32
    %118 = vector.broadcast %cst_64 : f32 to vector<32x64xf32>
    %119 = arith.cmpf ogt, %117, %118 : vector<32x64xf32>
    %cst_65 = arith.constant 2.000000e-01 : f32
    %120 = vector.broadcast %cst_65 : f32 to vector<32x64xf32>
    %121 = arith.mulf %120, %117 : vector<32x64xf32>
    %122 = arith.select %119, %117, %121 : vector<32x64xi1>, vector<32x64xf32>
    %cst_66 = arith.constant -1.000000e+30 : f32
    %123 = vector.broadcast %cst_66 : f32 to vector<32x64xf32>
    %124 = arith.select %2, %122, %123 : vector<32x64xi1>, vector<32x64xf32>
    %cst_67 = arith.constant dense<0xFF800000> : vector<32xf32>
    %125 = vector.multi_reduction <maximumf>, %124, %cst_67 [1] : vector<32x64xf32> to vector<32xf32>
    %126 = vector.shape_cast %125 : vector<32xf32> to vector<32x1xf32>
    %cst_68 = arith.constant -1.000000e+29 : f32
    %127 = vector.broadcast %cst_68 : f32 to vector<32x1xf32>
    %128 = arith.maximumf %126, %127 : vector<32x1xf32>
    %129 = vector.broadcast %128 : vector<32x1xf32> to vector<32x64xf32>
    %130 = arith.subf %124, %129 : vector<32x64xf32>
    %131 = math.exp %130 : vector<32x64xf32>
    %cst_69 = arith.constant dense<0.000000e+00> : vector<32xf32>
    %132 = vector.multi_reduction <add>, %131, %cst_69 [1] : vector<32x64xf32> to vector<32xf32>
    %133 = vector.shape_cast %132 : vector<32xf32> to vector<32x1xf32>
    %cst_70 = arith.constant 0.000000e+00 : f32
    %134 = vector.broadcast %cst_70 : f32 to vector<32x1xf32>
    %135 = arith.cmpf ogt, %133, %134 : vector<32x1xf32>
    %cst_71 = arith.constant 1.000000e+00 : f32
    %136 = vector.broadcast %cst_71 : f32 to vector<32x1xf32>
    %137 = arith.select %135, %133, %136 : vector<32x1xi1>, vector<32x1xf32>
    %cst_72 = arith.constant 1.000000e+00 : f32
    %138 = vector.broadcast %cst_72 : f32 to vector<32x1xf32>
    %139 = arith.divf %138, %137 : vector<32x1xf32>
    %140 = vector.broadcast %139 : vector<32x1xf32> to vector<32x64xf32>
    %141 = arith.mulf %131, %140 : vector<32x64xf32>
    %142 = arith.truncf %141 : vector<32x64xf32> to vector<32x64xbf16>
    %c3_73 = arith.constant 3 : index
    %c0_74 = arith.constant 0 : index
    %c0_75 = arith.constant 0 : index
    %143 = vector.load %arg6[%c3_73, %c0_74, %c0_75] : memref<4x32x64xbf16, #tpu.memory_space<vmem>>, vector<1x32x64xbf16>
    %144 = vector.shape_cast %143 : vector<1x32x64xbf16> to vector<32x64xbf16>
    %145 = vector.shape_cast %142 : vector<32x64xbf16> to vector<1x32x64xbf16>
    tpu.vector_store %arg6[%c3_73, %c0_74, %c0_75], %145 {strides = array<i32>} : memref<4x32x64xbf16, #tpu.memory_space<vmem>>, vector<1x32x64xbf16>,
    %c0_76 = arith.constant 0 : index
    %c48 = arith.constant 48 : index
    %146 = vector.load %arg1[%c0_76, %c48] : memref<64x64xbf16, #tpu.memory_space<vmem>>, vector<64x16xbf16>
    %cst_77 = arith.constant dense<0.000000e+00> : vector<32x16xf32>
    %147 = tpu.matmul %142, %146, %cst_77 {dimension_numbers = #tpu.dot_dimension_numbers<[1], [0], [0], [1], [0, 0, 1, 1], [], []>} : vector<32x64xbf16>, vector<64x16xbf16>, vector<32x16xf32> -> vector<32x16xf32>
    %c0_78 = arith.constant 0 : index
    %c48_79 = arith.constant 48 : index
    %148 = vector.load %arg7[%c0_78, %c48_79] : memref<32x128xf32, #tpu.memory_space<vmem>>, vector<32x16xf32>
    tpu.vector_store %arg7[%c0_78, %c48_79], %147 {strides = array<i32>} : memref<32x128xf32, #tpu.memory_space<vmem>>, vector<32x16xf32>,
    %c0_80 = arith.constant 0 : index
    %c0_81 = arith.constant 0 : index
    %149 = vector.load %arg7[%c0_80, %c0_81] : memref<32x128xf32, #tpu.memory_space<vmem>>, vector<32x128xf32>
    %c0_82 = arith.constant 0 : index
    %c0_83 = arith.constant 0 : index
    %150 = vector.load %arg5[%c0_82, %c0_83] : memref<32x128xf32, #tpu.memory_space<vmem>>, vector<32x128xf32>
    tpu.vector_store %arg5[%c0_82, %c0_83], %149 {strides = array<i32>} : memref<32x128xf32, #tpu.memory_space<vmem>>, vector<32x128xf32>,
    return
  }
  func.func @transform_0(%arg0: i32) -> (i32, i32) {
    %c0_i32 = arith.constant 0 : i32
    %c0_i32_0 = arith.constant 0 : i32
    %c0_i32_1 = arith.constant 0 : i32
    return %c0_i32, %c0_i32_0 : i32, i32
  }
  func.func @transform_1(%arg0: i32) -> (i32, i32) {
    %c0_i32 = arith.constant 0 : i32
    %c0_i32_0 = arith.constant 0 : i32
    %c0_i32_1 = arith.constant 0 : i32
    return %c0_i32, %c0_i32_0 : i32, i32
  }
  func.func @transform_2(%arg0: i32) -> (i32, i32) {
    %c0_i32 = arith.constant 0 : i32
    %c0_i32_0 = arith.constant 0 : i32
    return %arg0, %c0_i32 : i32, i32
  }
  func.func @transform_3(%arg0: i32) -> (i32, i32) {
    %c0_i32 = arith.constant 0 : i32
    %c0_i32_0 = arith.constant 0 : i32
    return %arg0, %c0_i32 : i32, i32
  }
  func.func @transform_4(%arg0: i32) -> (i32, i32) {
    %c0_i32 = arith.constant 0 : i32
    %c0_i32_0 = arith.constant 0 : i32
    return %arg0, %c0_i32 : i32, i32
  }
  func.func @transform_5(%arg0: i32) -> (i32, i32, i32) {
    %c0_i32 = arith.constant 0 : i32
    %c0_i32_0 = arith.constant 0 : i32
    %c0_i32_1 = arith.constant 0 : i32
    return %c0_i32, %arg0, %c0_i32_0 : i32, i32, i32
  }
}

</mosaic_0001>

<llo_original>
// kernel: tpu_custom_call.1
$region0: #{tpu_custom_call.1}
  #allocation0 [shape = 'u32[]', space=smem, size = 0x4, offset = 0x4, fixed_abs, tag = 'smem constant byte address 0x4 - core index']
  #allocation1 [shape = 'u32[72,128]{1,0:T(1,128)}', space=vmem, size = 0x9000, scoped, tag = 'internal scratch']
  #allocation2 [shape = 'f32[32,128]{1,0:T(8,128)}', space=vmem, size = 0x4000, scoped, tag = 'scratch operand']
  #allocation7 [shape = 's32[]', space=sflag, size = 0x4, offset = 0, fixed_abs, tag = 'sflag constant byte address 0x0 - dummy sync flag']
  %s0 = inlined_call_operand.vmem [shape: bf16[64,64], index: 0, kind: input, shape index: {}]
  %s1 = inlined_call_operand.vmem [shape: f32[4,64], index: 1, kind: input, shape index: {}]
  %s2 = inlined_call_operand.vmem [shape: f32[64,4], index: 2, kind: input, shape index: {}]
  %s3 = inlined_call_operand.vmem [shape: s8[64,64], index: 3, kind: input, shape index: {}]
  %s4 = inlined_call_operand.hbm [shape: f32[64,128], index: 4, kind: output, shape index: {0}]
  %s5 = inlined_call_operand.hbm [shape: bf16[4,64,64], index: 5, kind: output, shape index: {1}]
  %6 = xla_tuple %s4, %s5
  %s7 = sld [smem:[#allocation0]]
  $region57: #{tpu_custom_call.1} parent=0
    _
  %s9 = ssub.s32 1, %s7
  %s10 = scalar_select 0, %s9, %s7
  $region1: #{tpu_custom_call.1} parent=0
    #allocation3 [shape = 'u8[32768]{0}', space=vmem, size = 0x8000, scoped, tag = 'output window, operand 0']
    #allocation4 [shape = 's32[2]{0}', space=sflag, size = 0x8, scoped, tag = 'scoped memory for tpu_custom_call.1']
    #allocation5 [shape = 'u8[65536]{0}', space=vmem, size = 0x10000, scoped, tag = 'output window, operand 1']
    #allocation6 [shape = 's32[2]{0}', space=sflag, size = 0x8, scoped, tag = 'scoped memory for tpu_custom_call.1']
    %11 = vsyncpa [#allocation4], 0
    %s12 = scalar_lea.sflag [#allocation4], 1
    %13 = vsyncpa %s12, 0
    %14 = vsyncpa [#allocation6], 0
    %s15 = scalar_lea.sflag [#allocation6], 1
    %16 = vsyncpa %s15, 0
    loop: start=0, step=1, limit=4
    $region2: #{tpu_custom_call.1} parent=1 // loop_pre_header
      _
    $region3: #{tpu_custom_call.1} parent=1 // loop_header
      %s18 = sphi 0, %s22
      %p19 = scmp.ge.s32.totalorder %s18, 4
      %s26 = sphi 0, %s26
      %s28 = sphi 0, %s26
      %s29 = sphi 0, %s28
      %s43 = sphi 0, %s29
      %s47 = sphi 0, %s47
      %s49 = sphi 0, %s47
      %s50 = sphi 0, %s49
      %s64 = sphi 0, %s50
      %s70 = sphi 0, %s72
      %s73 = sphi 0, %s70
      %s74 = sphi 0, %s73
      %s90 = sphi 0, %s74
      %s96 = sphi 0, %s98
      %s99 = sphi 0, %s96
      %s100 = sphi 0, %s99
      %s116 = sphi 0, %s100
      %s122 = sphi 0, %s124
      %s125 = sphi 0, %s122
      %s126 = sphi 0, %s125
      %s142 = sphi 0, %s126
      %s148 = sphi 0, %s150
      %s151 = sphi 0, %s148
      %s152 = sphi 0, %s151
      %s168 = sphi 0, %s152
    $region4: #{tpu_custom_call.1} parent=1 // loop_header_branch
      %21 = sbr.rel (%p19) target = $region8
    $region5: #{tpu_custom_call.1} parent=1 // loop_body
      %s23 = ssub.s32 %s18, 1
      %s24 = ssub.s32 %s18, 2
      %s25 = sadd.s32 %s18, 1
      %s27 = sadd.s32 %s26, 1
      %p30 = scmp.eq.s32.totalorder %s18, 1
      %p31 = scmp.ne.s32.totalorder %s26, %s28
      %p32 = scmp.eq.s32.totalorder %s18, 0
      %p33 = por %p31, %p32
      %p34 = scmp.ne.s32.totalorder %s26, %s28
      %p35 = scmp.eq.s32.totalorder %s23, 1
      %p36 = por %p34, %p35
      %p37 = scmp.ne.s32.totalorder %s28, %s29
      %p38 = scmp.eq.s32.totalorder %s23, 0
      %p39 = por %p37, %p38
      %p40 = scmp.ne.s32.totalorder %s28, %s29
      %p41 = scmp.eq.s32.totalorder %s24, 1
      %p42 = por %p40, %p41
      %p44 = scmp.ne.s32.totalorder %s29, %s43
      %p45 = scmp.eq.s32.totalorder %s24, 0
      %p46 = por %p44, %p45
      %s48 = sadd.s32 %s47, 1
      %p51 = scmp.eq.s32.totalorder %s18, 1
      %p52 = scmp.ne.s32.totalorder %s47, %s49
      %p53 = scmp.eq.s32.totalorder %s18, 0
      %p54 = por %p52, %p53
      %p55 = scmp.ne.s32.totalorder %s47, %s49
      %p56 = scmp.eq.s32.totalorder %s23, 1
      %p57 = por %p55, %p56
      %p58 = scmp.ne.s32.totalorder %s49, %s50
      %p59 = scmp.eq.s32.totalorder %s23, 0
      %p60 = por %p58, %p59
      %p61 = scmp.ne.s32.totalorder %s49, %s50
      %p62 = scmp.eq.s32.totalorder %s24, 1
      %p63 = por %p61, %p62
      %p65 = scmp.ne.s32.totalorder %s50, %s64
      %p66 = scmp.eq.s32.totalorder %s24, 0
      %p67 = por %p65, %p66
      %s68 = ssub.s32 %s18, %s25
      %p69 = scmp.eq.s32.totalorder %s68, 0
      %s71 = sadd.s32 %s70, 1
      %s72 = scalar_select %p69, %s70, %s71
      %p75 = pneg %p69
      %p76 = scmp.eq.s32.totalorder %s18, 1
      %p77 = por %p75, %p76
      %p78 = scmp.ne.s32.totalorder %s70, %s73
      %p79 = scmp.eq.s32.totalorder %s18, 0
      %p80 = por %p78, %p79
      %p81 = scmp.ne.s32.totalorder %s70, %s73
      %p82 = scmp.eq.s32.totalorder %s23, 1
      %p83 = por %p81, %p82
      %p84 = scmp.ne.s32.totalorder %s73, %s74
      %p85 = scmp.eq.s32.totalorder %s23, 0
      %p86 = por %p84, %p85
      %p87 = scmp.ne.s32.totalorder %s73, %s74
      %p88 = scmp.eq.s32.totalorder %s24, 1
      %p89 = por %p87, %p88
      %p91 = scmp.ne.s32.totalorder %s74, %s90
      %p92 = scmp.eq.s32.totalorder %s24, 0
      %p93 = por %p91, %p92
      %s94 = ssub.s32 %s18, %s25
      %p95 = scmp.eq.s32.totalorder %s94, 0
      %s97 = sadd.s32 %s96, 1
      %s98 = scalar_select %p95, %s96, %s97
      %p101 = pneg %p95
      %p102 = scmp.eq.s32.totalorder %s18, 1
      %p103 = por %p101, %p102
      %p104 = scmp.ne.s32.totalorder %s96, %s99
      %p105 = scmp.eq.s32.totalorder %s18, 0
      %p106 = por %p104, %p105
      %p107 = scmp.ne.s32.totalorder %s96, %s99
      %p108 = scmp.eq.s32.totalorder %s23, 1
      %p109 = por %p107, %p108
      %p110 = scmp.ne.s32.totalorder %s99, %s100
      %p111 = scmp.eq.s32.totalorder %s23, 0
      %p112 = por %p110, %p111
      %p113 = scmp.ne.s32.totalorder %s99, %s100
      %p114 = scmp.eq.s32.totalorder %s24, 1
      %p115 = por %p113, %p114
      %p117 = scmp.ne.s32.totalorder %s100, %s116
      %p118 = scmp.eq.s32.totalorder %s24, 0
      %p119 = por %p117, %p118
      %s120 = ssub.s32 %s18, %s25
      %p121 = scmp.eq.s32.totalorder %s120, 0
      %s123 = sadd.s32 %s122, 1
      %s124 = scalar_select %p121, %s122, %s123
      %p127 = pneg %p121
      %p128 = scmp.eq.s32.totalorder %s18, 1
      %p129 = por %p127, %p128
      %p130 = scmp.ne.s32.totalorder %s122, %s125
      %p131 = scmp.eq.s32.totalorder %s18, 0
      %p132 = por %p130, %p131
      %p133 = scmp.ne.s32.totalorder %s122, %s125
      %p134 = scmp.eq.s32.totalorder %s23, 1
      %p135 = por %p133, %p134
      %p136 = scmp.ne.s32.totalorder %s125, %s126
      %p137 = scmp.eq.s32.totalorder %s23, 0
      %p138 = por %p136, %p137
      %p139 = scmp.ne.s32.totalorder %s125, %s126
      %p140 = scmp.eq.s32.totalorder %s24, 1
      %p141 = por %p139, %p140
      %p143 = scmp.ne.s32.totalorder %s126, %s142
      %p144 = scmp.eq.s32.totalorder %s24, 0
      %p145 = por %p143, %p144
      %s146 = ssub.s32 %s18, %s25
      %p147 = scmp.eq.s32.totalorder %s146, 0
      %s149 = sadd.s32 %s148, 1
      %s150 = scalar_select %p147, %s148, %s149
      %p153 = pneg %p147
      %p154 = scmp.eq.s32.totalorder %s18, 1
      %p155 = por %p153, %p154
      %p156 = scmp.ne.s32.totalorder %s148, %s151
      %p157 = scmp.eq.s32.totalorder %s18, 0
      %p158 = por %p156, %p157
      %p159 = scmp.ne.s32.totalorder %s148, %s151
      %p160 = scmp.eq.s32.totalorder %s23, 1
      %p161 = por %p159, %p160
      %p162 = scmp.ne.s32.totalorder %s151, %s152
      %p163 = scmp.eq.s32.totalorder %s23, 0
      %p164 = por %p162, %p163
      %p165 = scmp.ne.s32.totalorder %s151, %s152
      %p166 = scmp.eq.s32.totalorder %s24, 1
      %p167 = por %p165, %p166
      %p169 = scmp.ne.s32.totalorder %s152, %s168
      %p170 = scmp.eq.s32.totalorder %s24, 0
      %p171 = por %p169, %p170
      %p172 = scmp.le.s32.totalorder 1, %s18
      %p173 = scmp.lt.s32.totalorder %s18, 3
      %p174 = pnand %p172, %p173
      %p175 = pneg %p174
      // Predicated region
      $region9: #{tpu_custom_call.1} parent=5 // pred_check
        _
      $region10: #{tpu_custom_call.1} parent=5 // pred_check_branch
        %177 = sbr.rel (%p174) target = $region12
      $region11: #{tpu_custom_call.1} parent=5 // pred_region
        %s178 = ssub.s32 %s18, 1
        // Predicated region
        $region13: #{tpu_custom_call.1} parent=11 // pred_check
          %p179 = pneg %p39
        $region14: #{tpu_custom_call.1} parent=11 // pred_check_branch
          %181 = sbr.rel (%p179) target = $region16
        $region15: #{tpu_custom_call.1} parent=11 // pred_region
          _
        $region16: #{tpu_custom_call.1} parent=11 // pred_fallthru
          _
        // Predicated region
        $region17: #{tpu_custom_call.1} parent=11 // pred_check
          %p182 = pneg %p60
        $region18: #{tpu_custom_call.1} parent=11 // pred_check_branch
          %184 = sbr.rel (%p182) target = $region20
        $region19: #{tpu_custom_call.1} parent=11 // pred_region
          _
        $region20: #{tpu_custom_call.1} parent=11 // pred_fallthru
          _
      $region12: #{tpu_custom_call.1} parent=5 // pred_fallthru
        _
      %p185 = scmp.lt.s32.totalorder %s18, 2
      // Predicated region
      $region21: #{tpu_custom_call.1} parent=5 // pred_check
        %p186 = pneg %p185
      $region22: #{tpu_custom_call.1} parent=5 // pred_check_branch
        %188 = sbr.rel (%p186) target = $region24
      $region23: #{tpu_custom_call.1} parent=5 // pred_region
        // Predicated region
        $region25: #{tpu_custom_call.1} parent=23 // pred_check
          %p189 = pneg %p80
        $region26: #{tpu_custom_call.1} parent=23 // pred_check_branch
          %191 = sbr.rel (%p189) target = $region28
        $region27: #{tpu_custom_call.1} parent=23 // pred_region
          %s192 = smul.u32 4, %s18
          %p193 = scmp.lt.s32.totalorder %s192, 7
          %s194 = scalar_select %p193, %s192, 7
          %s195 = smul.addr %s194, 8
          %s196 = scalar_lea.vmem %s2, %s195
          %s197 = smul.u32 4, %s18
        $region28: #{tpu_custom_call.1} parent=23 // pred_fallthru
          _
        // Predicated region
        $region29: #{tpu_custom_call.1} parent=23 // pred_check
          %p198 = pneg %p106
        $region30: #{tpu_custom_call.1} parent=23 // pred_check_branch
          %200 = sbr.rel (%p198) target = $region32
        $region31: #{tpu_custom_call.1} parent=23 // pred_region
          %p201 = scmp.lt.s32.totalorder %s18, 1
          %s202 = scalar_select %p201, %s18, 1
          %s203 = smul.addr %s202, 8
          %s204 = scalar_lea.vmem %s3, %s203
        $region32: #{tpu_custom_call.1} parent=23 // pred_fallthru
          _
      $region24: #{tpu_custom_call.1} parent=5 // pred_fallthru
        _
      %p205 = scmp.le.s32.totalorder 1, %s18
      %p206 = scmp.lt.s32.totalorder %s18, 3
      %p207 = pnand %p205, %p206
      %p208 = pneg %p207
      // Predicated region
      $region33: #{tpu_custom_call.1} parent=5 // pred_check
        _
      $region34: #{tpu_custom_call.1} parent=5 // pred_check_branch
        %210 = sbr.rel (%p207) target = $region36
      $region35: #{tpu_custom_call.1} parent=5 // pred_region
        %s211 = ssub.s32 %s18, 1
        %p212 = pneg %p39
        %p213 = pneg %p36
        %p214 = pneg %p60
        %p215 = pneg %p57
        %s216 = smul.u32 4, %s23
        %p217 = scmp.lt.s32.totalorder %s216, 7
        %s218 = scalar_select %p217, %s216, 7
        %s219 = smul.addr %s218, 8
        %s220 = scalar_lea.vmem %s2, %s219
        %p221 = pneg %p86
        %p222 = pneg %p83
        %p223 = scmp.lt.s32.totalorder %s23, 1
        %s224 = scalar_select %p223, %s23, 1
        %s225 = smul.addr %s224, 8
        %s226 = scalar_lea.vmem %s3, %s225
        %p227 = pneg %p112
        %p228 = pneg %p109
        %p229 = pneg %p138
        %p230 = pneg %p135
        %s231 = sand.u32 %s125, 1
        %s232 = scalar_lea.sflag [#allocation4], %s231
        %s233 = sand.u32 %s125, 1
        %s234 = smul.addr %s233, 32
        %s235 = scalar_lea.vmem [#allocation3], %s234
        %p236 = pneg %p164
        %p237 = pneg %p161
        %s238 = sand.u32 %s151, 1
        %s239 = scalar_lea.sflag [#allocation6], %s238
        %s240 = sand.u32 %s151, 1
        %s241 = smul.addr %s240, 64
        %s242 = scalar_lea.vmem [#allocation5], %s241
        %s243 = smul.u32 4, %s23
        %p244 = scmp.lt.s32.totalorder %s243, 7
        %s245 = scalar_select %p244, %s243, 7
        %s246 = smul.addr %s245, 8
        %s247 = scalar_lea.vmem %s2, %s246
        %s248 = smul.u32 4, %s23
        %p249 = scmp.lt.s32.totalorder %s23, 1
        %s250 = scalar_select %p249, %s23, 1
        %s251 = smul.addr %s250, 8
        %s252 = scalar_lea.vmem %s3, %s251
        %s253 = smul.u32 4, %s23
        %s254 = smul.u32 4, %s23
        %v258 = vld [vmem:[%s252] sm:$0xff]
        %vm259 = vnez %v258
        %vm260 = vcmask 1048064
        %261 = vst.msk [vmem:[#allocation2] sm:$0xff] %vm260, 0.0
        %262 = vst.msk [vmem:[#allocation2 + $0x8] sm:$0xff] %vm260, 0.0
        %263 = vst.msk [vmem:[#allocation2 + $0x10] sm:$0xff] %vm260, 0.0
        %264 = vst.msk [vmem:[#allocation2 + $0x18] sm:$0xff] %vm260, 0.0
        %v265 = vld [vmem:[%s1] sm:$0x1]
        %v266 = vld [vmem:[%s247] sm:$0xff]
        %v267 = vld [vmem:[%s247 + $0x8] sm:$0xff]
        %v268 = vld [vmem:[%s247 + $0x10] sm:$0xff]
        %v269 = vld [vmem:[%s247 + $0x18] sm:$0xff]
        %271 = vset.pattern.permute.xlu0 0
        %272 = vperm.xlu0 %271, %v266
        %v273 = vpop.permute.xlu0 %272
        %276 = vset.pattern.permute.xlu0 0
        %277 = vperm.xlu0 %276, %v267
        %v278 = vpop.permute.xlu0 %277
        %281 = vset.pattern.permute.xlu0 0
        %282 = vperm.xlu0 %281, %v268
        %v283 = vpop.permute.xlu0 %282
        %286 = vset.pattern.permute.xlu0 0
        %287 = vperm.xlu0 %286, %v269
        %v288 = vpop.permute.xlu0 %287
        %v290 = vperm.slane %v265, 0
        %v291 = vadd.f32 %v273, %v290
        %v292 = vadd.f32 %v278, %v290
        %v293 = vadd.f32 %v283, %v290
        %v294 = vadd.f32 %v288, %v290
        %vm295 = vcmp.gt.f32.partialorder %v291, 0.0
        %vm296 = vcmp.gt.f32.partialorder %v292, 0.0
        %vm297 = vcmp.gt.f32.partialorder %v293, 0.0
        %vm298 = vcmp.gt.f32.partialorder %v294, 0.0
        %v299 = vmul.f32 %v291, 0.2
        %v300 = vmul.f32 %v292, 0.2
        %v301 = vmul.f32 %v293, 0.2
        %v302 = vmul.f32 %v294, 0.2
        %v303 = vsel %vm295, %v291, %v299
        %v304 = vsel %vm296, %v292, %v300
        %v305 = vsel %vm297, %v293, %v301
        %v306 = vsel %vm298, %v294, %v302
        %v307 = vsel %vm259, 16843009, 0
        %v308 = vunpack.c.0.s8 %v307
        %v309 = vunpack.c.1.s8 %v307
        %v310 = vunpack.c.2.s8 %v307
        %v311 = vunpack.c.3.s8 %v307
        %v312 = vpack.c.b16 %v308, %v308
        %v313 = vpack.c.b8 %v312, %v312
        %v314 = vpack.c.b16 %v309, %v309
        %v315 = vpack.c.b8 %v314, %v314
        %v316 = vpack.c.b16 %v310, %v310
        %v317 = vpack.c.b8 %v316, %v316
        %v318 = vpack.c.b16 %v311, %v311
        %v319 = vpack.c.b8 %v318, %v318
        %vm320 = vnez %v313
        %vm321 = vnez %v315
        %vm322 = vnez %v317
        %vm323 = vnez %v319
        %v324 = vsel %vm320, 16843009, 0
        %v325 = vsel %vm321, 16843009, 0
        %v326 = vsel %vm322, 16843009, 0
        %v327 = vsel %vm323, 16843009, 0
        %v328 = vunpack.c.0.s8 %v324
        %v329 = vunpack.c.0.s8 %v325
        %v330 = vunpack.c.0.s8 %v326
        %v331 = vunpack.c.0.s8 %v327
        %vm332 = vcmp.ne.s32.totalorder %v328, 0
        %vm333 = vcmp.ne.s32.totalorder %v329, 0
        %vm334 = vcmp.ne.s32.totalorder %v330, 0
        %vm335 = vcmp.ne.s32.totalorder %v331, 0
        %v336 = vsel %vm332, %v303, -1e+30
        %v337 = vsel %vm333, %v304, -1e+30
        %v338 = vsel %vm334, %v305, -1e+30
        %v339 = vsel %vm335, %v306, -1e+30
        %vm340 = vcmask 523264
        %v341 = vsel %vm340, %v336, -inf
        %342 = vmax.xlane.f32.xlu0 %v341
        %v343 = vpop.xlane.xlu0 %342
        %v344 = vsel %vm340, %v337, -inf
        %345 = vmax.xlane.f32.xlu0 %v344
        %v346 = vpop.xlane.xlu0 %345
        %v347 = vsel %vm340, %v338, -inf
        %348 = vmax.xlane.f32.xlu0 %v347
        %v349 = vpop.xlane.xlu0 %348
        %v350 = vsel %vm340, %v339, -inf
        %351 = vmax.xlane.f32.xlu0 %v350
        %v352 = vpop.xlane.xlu0 %351
        %v353 = vmax.f32 %v343, -1e+29
        %v354 = vmax.f32 %v346, -1e+29
        %v355 = vmax.f32 %v349, -1e+29
        %v356 = vmax.f32 %v352, -1e+29
        %v357 = vsub.f32 %v336, %v353
        %v358 = vsub.f32 %v337, %v354
        %v359 = vsub.f32 %v338, %v355
        %v360 = vsub.f32 %v339, %v356
        %v361 = vmul.f32 %v357, 1.442695
        %v362 = vpow.pop %v361
        %v363 = vmul.f32 %v358, 1.442695
        %v364 = vpow.pop %v363
        %v365 = vmul.f32 %v359, 1.442695
        %v366 = vpow.pop %v365
        %v367 = vmul.f32 %v360, 1.442695
        %v368 = vpow.pop %v367
        %v369 = vsel %vm340, %v362, 0.0
        %370 = vadd.xlane.f32.xlu0 %v369
        %v371 = vpop.xlane.xlu0 %370
        %v372 = vsel %vm340, %v364, 0.0
        %373 = vadd.xlane.f32.xlu0 %v372
        %v374 = vpop.xlane.xlu0 %373
        %v375 = vsel %vm340, %v366, 0.0
        %376 = vadd.xlane.f32.xlu0 %v375
        %v377 = vpop.xlane.xlu0 %376
        %v378 = vsel %vm340, %v368, 0.0
        %379 = vadd.xlane.f32.xlu0 %v378
        %v380 = vpop.xlane.xlu0 %379
        %vm381 = vcmp.gt.f32.partialorder %v371, 0.0
        %vm382 = vcmp.gt.f32.partialorder %v374, 0.0
        %vm383 = vcmp.gt.f32.partialorder %v377, 0.0
        %vm384 = vcmp.gt.f32.partialorder %v380, 0.0
        %v385 = vsel %vm381, %v371, 1.0
        %v386 = vsel %vm382, %v374, 1.0
        %v387 = vsel %vm383, %v377, 1.0
        %v388 = vsel %vm384, %v380, 1.0
        %v389 = vrcp.pop %v385
        %v390 = vmul.f32 %v385, %v389
        %v391 = vsub.f32 1.0, %v390
        %v392 = vmul.f32 %v389, %v391
        %v393 = vadd.f32 %v389, %v392
        %vm394 = vweird.f32 %v385
        %vm395 = vweird.f32 %v389
        %vm396 = vmor %vm394, %vm395
        %v397 = vsel %vm396, %v389, %v393
        %v398 = vand.u32 2147483647, %v385
        %vm399 = vcmp.eq.f32.partialorder %v398, 8.507059e+37
        %v400 = vand.u32 %v385, 2147483648
        %v401 = vor.u32 1.1754944e-38, %v400
        %v402 = vsel %vm399, %v401, %v397
        %v403 = vmul.f32 1.0, %v402
        %v404 = vrcp.pop %v386
        %v405 = vmul.f32 %v386, %v404
        %v406 = vsub.f32 1.0, %v405
        %v407 = vmul.f32 %v404, %v406
        %v408 = vadd.f32 %v404, %v407
        %vm409 = vweird.f32 %v386
        %vm410 = vweird.f32 %v404
        %vm411 = vmor %vm409, %vm410
        %v412 = vsel %vm411, %v404, %v408
        %v413 = vand.u32 2147483647, %v386
        %vm414 = vcmp.eq.f32.partialorder %v413, 8.507059e+37
        %v415 = vand.u32 %v386, 2147483648
        %v416 = vor.u32 1.1754944e-38, %v415
        %v417 = vsel %vm414, %v416, %v412
        %v418 = vmul.f32 1.0, %v417
        %v419 = vrcp.pop %v387
        %v420 = vmul.f32 %v387, %v419
        %v421 = vsub.f32 1.0, %v420
        %v422 = vmul.f32 %v419, %v421
        %v423 = vadd.f32 %v419, %v422
        %vm424 = vweird.f32 %v387
        %vm425 = vweird.f32 %v419
        %vm426 = vmor %vm424, %vm425
        %v427 = vsel %vm426, %v419, %v423
        %v428 = vand.u32 2147483647, %v387
        %vm429 = vcmp.eq.f32.partialorder %v428, 8.507059e+37
        %v430 = vand.u32 %v387, 2147483648
        %v431 = vor.u32 1.1754944e-38, %v430
        %v432 = vsel %vm429, %v431, %v427
        %v433 = vmul.f32 1.0, %v432
        %v434 = vrcp.pop %v388
        %v435 = vmul.f32 %v388, %v434
        %v436 = vsub.f32 1.0, %v435
        %v437 = vmul.f32 %v434, %v436
        %v438 = vadd.f32 %v434, %v437
        %vm439 = vweird.f32 %v388
        %vm440 = vweird.f32 %v434
        %vm441 = vmor %vm439, %vm440
        %v442 = vsel %vm441, %v434, %v438
        %v443 = vand.u32 2147483647, %v388
        %vm444 = vcmp.eq.f32.partialorder %v443, 8.507059e+37
        %v445 = vand.u32 %v388, 2147483648
        %v446 = vor.u32 1.1754944e-38, %v445
        %v447 = vsel %vm444, %v446, %v442
        %v448 = vmul.f32 1.0, %v447
        %v449 = vmul.f32 %v362, %v403
        %v450 = vmul.f32 %v364, %v418
        %v451 = vmul.f32 %v366, %v433
        %v452 = vmul.f32 %v368, %v448
        %v453 = vpack.c.bf16 %v449, %v449
        %v454 = vpack.c.bf16 %v450, %v450
        %v455 = vpack.c.bf16 %v451, %v451
        %v456 = vpack.c.bf16 %v452, %v452
        %vm457 = vcmask 519168
        %458 = vst.msk [vmem:[%s242] sm:$0xf] %vm457, %v453
        %459 = vst.msk [vmem:[%s242 + $0x4] sm:$0xf] %vm457, %v454
        %460 = vst.msk [vmem:[%s242 + $0x8] sm:$0xf] %vm457, %v455
        %461 = vst.msk [vmem:[%s242 + $0xc] sm:$0xf] %vm457, %v456
        %v462 = vld [vmem:[%s0] sm:$0xf]
        %v463 = vld [vmem:[%s0 + $0x4] sm:$0xf]
        %v464 = vld [vmem:[%s0 + $0x8] sm:$0xf]
        %v465 = vld [vmem:[%s0 + $0xc] sm:$0xf]
        %v466 = vld [vmem:[%s0 + $0x10] sm:$0xf]
        %v467 = vld [vmem:[%s0 + $0x14] sm:$0xf]
        %v468 = vld [vmem:[%s0 + $0x18] sm:$0xf]
        %v469 = vld [vmem:[%s0 + $0x1c] sm:$0xf]
        %v474 = vunpack.c.l.b16 %v453
        %v475 = vunpack.c.l.b16 %v454
        %v476 = vunpack.c.l.b16 %v455
        %v477 = vunpack.c.l.b16 %v456
        %v478 = vpack.c.b16 %v475, %v474
        %v479 = vpack.c.b16 %v477, %v476
        %v488 = vunpack.c.l.b16 %v462
        %v489 = vunpack.c.l.b16 %v463
        %v490 = vunpack.c.l.b16 %v464
        %v491 = vunpack.c.l.b16 %v465
        %v492 = vunpack.c.l.b16 %v466
        %v493 = vunpack.c.l.b16 %v467
        %v494 = vunpack.c.l.b16 %v468
        %v495 = vunpack.c.l.b16 %v469
        %v496 = vpack.c.b16 %v489, %v488
        %v497 = vpack.c.b16 %v491, %v490
        %v498 = vpack.c.b16 %v493, %v492
        %v499 = vpack.c.b16 %v495, %v494
        %v505 = vsel %vm340, %v478, 0
        %v508 = vsel %vm340, %v479, 0
        %510 = vmatpush.bf16.msra.mxu0 0
        %511 = vmatpush.bf16.msra.mxu0 0
        %512 = vmatpush.bf16.msra.mxu0 0
        %513 = vmatpush.bf16.msra.mxu0 0
        %514 = vmatpush.bf16.msra.mxu0 %v499
        %515 = vmatpush.bf16.msra.mxu0 %v498
        %516 = vmatpush.bf16.msra.mxu0 %v497
        %517 = vmatpush.bf16.msra.mxu0 %v496
        %518 = vmatmul.bf16.gmra.mxu0 %v505
        %v519 = vpop.f32.mrf.mxu0
        %v520 = vadd.f32 0.0, %v519
        %v521 = vpop.f32.mrf.mxu0
        %v522 = vadd.f32 0.0, %v521
        %523 = vmatmul.bf16.gmra.mxu0 %v508
        %v524 = vpop.f32.mrf.mxu0
        %v525 = vadd.f32 0.0, %v524
        %v526 = vpop.f32.mrf.mxu0
        %v527 = vadd.f32 0.0, %v526
        %528 = vdwg.mxu0
        %vm529 = vcmask 130048
        %530 = vst.msk [vmem:[#allocation2] sm:$0xff] %vm529, %v520
        %531 = vst.msk [vmem:[#allocation2 + $0x8] sm:$0xff] %vm529, %v522
        %532 = vst.msk [vmem:[#allocation2 + $0x10] sm:$0xff] %vm529, %v525
        %533 = vst.msk [vmem:[#allocation2 + $0x18] sm:$0xff] %vm529, %v527
        %v534 = vld [vmem:[%s1 + $0x1] sm:$0x1]
        %v535 = vld [vmem:[%s247] sm:$0xff]
        %v536 = vld [vmem:[%s247 + $0x8] sm:$0xff]
        %v537 = vld [vmem:[%s247 + $0x10] sm:$0xff]
        %v538 = vld [vmem:[%s247 + $0x18] sm:$0xff]
        %540 = vset.pattern.permute.xlu0 1
        %541 = vperm.xlu0 %540, %v535
        %v542 = vpop.permute.xlu0 %541
        %545 = vset.pattern.permute.xlu0 1
        %546 = vperm.xlu0 %545, %v536
        %v547 = vpop.permute.xlu0 %546
        %550 = vset.pattern.permute.xlu0 1
        %551 = vperm.xlu0 %550, %v537
        %v552 = vpop.permute.xlu0 %551
        %555 = vset.pattern.permute.xlu0 1
        %556 = vperm.xlu0 %555, %v538
        %v557 = vpop.permute.xlu0 %556
        %v559 = vperm.slane %v534, 0
        %v560 = vadd.f32 %v542, %v559
        %v561 = vadd.f32 %v547, %v559
        %v562 = vadd.f32 %v552, %v559
        %v563 = vadd.f32 %v557, %v559
        %vm564 = vcmp.gt.f32.partialorder %v560, 0.0
        %vm565 = vcmp.gt.f32.partialorder %v561, 0.0
        %vm566 = vcmp.gt.f32.partialorder %v562, 0.0
        %vm567 = vcmp.gt.f32.partialorder %v563, 0.0
        %v568 = vmul.f32 %v560, 0.2
        %v569 = vmul.f32 %v561, 0.2
        %v570 = vmul.f32 %v562, 0.2
        %v571 = vmul.f32 %v563, 0.2
        %v572 = vsel %vm564, %v560, %v568
        %v573 = vsel %vm565, %v561, %v569
        %v574 = vsel %vm566, %v562, %v570
        %v575 = vsel %vm567, %v563, %v571
        %v576 = vsel %vm332, %v572, -1e+30
        %v577 = vsel %vm333, %v573, -1e+30
        %v578 = vsel %vm334, %v574, -1e+30
        %v579 = vsel %vm335, %v575, -1e+30
        %v580 = vsel %vm340, %v576, -inf
        %581 = vmax.xlane.f32.xlu0 %v580
        %v582 = vpop.xlane.xlu0 %581
        %v583 = vsel %vm340, %v577, -inf
        %584 = vmax.xlane.f32.xlu0 %v583
        %v585 = vpop.xlane.xlu0 %584
        %v586 = vsel %vm340, %v578, -inf
        %587 = vmax.xlane.f32.xlu0 %v586
        %v588 = vpop.xlane.xlu0 %587
        %v589 = vsel %vm340, %v579, -inf
        %590 = vmax.xlane.f32.xlu0 %v589
        %v591 = vpop.xlane.xlu0 %590
        %v592 = vmax.f32 %v582, -1e+29
        %v593 = vmax.f32 %v585, -1e+29
        %v594 = vmax.f32 %v588, -1e+29
        %v595 = vmax.f32 %v591, -1e+29
        %v596 = vsub.f32 %v576, %v592
        %v597 = vsub.f32 %v577, %v593
        %v598 = vsub.f32 %v578, %v594
        %v599 = vsub.f32 %v579, %v595
        %v600 = vmul.f32 %v596, 1.442695
        %v601 = vpow.pop %v600
        %v602 = vmul.f32 %v597, 1.442695
        %v603 = vpow.pop %v602
        %v604 = vmul.f32 %v598, 1.442695
        %v605 = vpow.pop %v604
        %v606 = vmul.f32 %v599, 1.442695
        %v607 = vpow.pop %v606
        %v608 = vsel %vm340, %v601, 0.0
        %609 = vadd.xlane.f32.xlu0 %v608
        %v610 = vpop.xlane.xlu0 %609
        %v611 = vsel %vm340, %v603, 0.0
        %612 = vadd.xlane.f32.xlu0 %v611
        %v613 = vpop.xlane.xlu0 %612
        %v614 = vsel %vm340, %v605, 0.0
        %615 = vadd.xlane.f32.xlu0 %v614
        %v616 = vpop.xlane.xlu0 %615
        %v617 = vsel %vm340, %v607, 0.0
        %618 = vadd.xlane.f32.xlu0 %v617
        %v619 = vpop.xlane.xlu0 %618
        %vm620 = vcmp.gt.f32.partialorder %v610, 0.0
        %vm621 = vcmp.gt.f32.partialorder %v613, 0.0
        %vm622 = vcmp.gt.f32.partialorder %v616, 0.0
        %vm623 = vcmp.gt.f32.partialorder %v619, 0.0
        %v624 = vsel %vm620, %v610, 1.0
        %v625 = vsel %vm621, %v613, 1.0
        %v626 = vsel %vm622, %v616, 1.0
        %v627 = vsel %vm623, %v619, 1.0
        %v628 = vrcp.pop %v624
        %v629 = vmul.f32 %v624, %v628
        %v630 = vsub.f32 1.0, %v629
        %v631 = vmul.f32 %v628, %v630
        %v632 = vadd.f32 %v628, %v631
        %vm633 = vweird.f32 %v624
        %vm634 = vweird.f32 %v628
        %vm635 = vmor %vm633, %vm634
        %v636 = vsel %vm635, %v628, %v632
        %v637 = vand.u32 2147483647, %v624
        %vm638 = vcmp.eq.f32.partialorder %v637, 8.507059e+37
        %v639 = vand.u32 %v624, 2147483648
        %v640 = vor.u32 1.1754944e-38, %v639
        %v641 = vsel %vm638, %v640, %v636
        %v642 = vmul.f32 1.0, %v641
        %v643 = vrcp.pop %v625
        %v644 = vmul.f32 %v625, %v643
        %v645 = vsub.f32 1.0, %v644
        %v646 = vmul.f32 %v643, %v645
        %v647 = vadd.f32 %v643, %v646
        %vm648 = vweird.f32 %v625
        %vm649 = vweird.f32 %v643
        %vm650 = vmor %vm648, %vm649
        %v651 = vsel %vm650, %v643, %v647
        %v652 = vand.u32 2147483647, %v625
        %vm653 = vcmp.eq.f32.partialorder %v652, 8.507059e+37
        %v654 = vand.u32 %v625, 2147483648
        %v655 = vor.u32 1.1754944e-38, %v654
        %v656 = vsel %vm653, %v655, %v651
        %v657 = vmul.f32 1.0, %v656
        %v658 = vrcp.pop %v626
        %v659 = vmul.f32 %v626, %v658
        %v660 = vsub.f32 1.0, %v659
        %v661 = vmul.f32 %v658, %v660
        %v662 = vadd.f32 %v658, %v661
        %vm663 = vweird.f32 %v626
        %vm664 = vweird.f32 %v658
        %vm665 = vmor %vm663, %vm664
        %v666 = vsel %vm665, %v658, %v662
        %v667 = vand.u32 2147483647, %v626
        %vm668 = vcmp.eq.f32.partialorder %v667, 8.507059e+37
        %v669 = vand.u32 %v626, 2147483648
        %v670 = vor.u32 1.1754944e-38, %v669
        %v671 = vsel %vm668, %v670, %v666
        %v672 = vmul.f32 1.0, %v671
        %v673 = vrcp.pop %v627
        %v674 = vmul.f32 %v627, %v673
        %v675 = vsub.f32 1.0, %v674
        %v676 = vmul.f32 %v673, %v675
        %v677 = vadd.f32 %v673, %v676
        %vm678 = vweird.f32 %v627
        %vm679 = vweird.f32 %v673
        %vm680 = vmor %vm678, %vm679
        %v681 = vsel %vm680, %v673, %v677
        %v682 = vand.u32 2147483647, %v627
        %vm683 = vcmp.eq.f32.partialorder %v682, 8.507059e+37
        %v684 = vand.u32 %v627, 2147483648
        %v685 = vor.u32 1.1754944e-38, %v684
        %v686 = vsel %vm683, %v685, %v681
        %v687 = vmul.f32 1.0, %v686
        %v688 = vmul.f32 %v601, %v642
        %v689 = vmul.f32 %v603, %v657
        %v690 = vmul.f32 %v605, %v672
        %v691 = vmul.f32 %v607, %v687
        %v692 = vpack.c.bf16 %v688, %v688
        %v693 = vpack.c.bf16 %v689, %v689
        %v694 = vpack.c.bf16 %v690, %v690
        %v695 = vpack.c.bf16 %v691, %v691
        %s696 = scalar_lea.vmem %s242, 16 [#allocation5]
        %697 = vst.msk [vmem:[%s696] sm:$0xf] %vm457, %v692
        %698 = vst.msk [vmem:[%s696 + $0x4] sm:$0xf] %vm457, %v693
        %699 = vst.msk [vmem:[%s696 + $0x8] sm:$0xf] %vm457, %v694
        %700 = vst.msk [vmem:[%s696 + $0xc] sm:$0xf] %vm457, %v695
        %v701 = vld [vmem:[%s0] sm:$0xf]
        %v702 = vld [vmem:[%s0 + $0x4] sm:$0xf]
        %v703 = vld [vmem:[%s0 + $0x8] sm:$0xf]
        %v704 = vld [vmem:[%s0 + $0xc] sm:$0xf]
        %v705 = vld [vmem:[%s0 + $0x10] sm:$0xf]
        %v706 = vld [vmem:[%s0 + $0x14] sm:$0xf]
        %v707 = vld [vmem:[%s0 + $0x18] sm:$0xf]
        %v708 = vld [vmem:[%s0 + $0x1c] sm:$0xf]
        %v713 = vunpack.c.l.b16 %v692
        %v714 = vunpack.c.l.b16 %v693
        %v715 = vunpack.c.l.b16 %v694
        %v716 = vunpack.c.l.b16 %v695
        %v717 = vpack.c.b16 %v714, %v713
        %v718 = vpack.c.b16 %v716, %v715
        %v727 = vunpack.c.l.b16 %v701
        %v728 = vunpack.c.l.b16 %v702
        %v729 = vunpack.c.l.b16 %v703
        %v730 = vunpack.c.l.b16 %v704
        %v731 = vunpack.c.l.b16 %v705
        %v732 = vunpack.c.l.b16 %v706
        %v733 = vunpack.c.l.b16 %v707
        %v734 = vunpack.c.l.b16 %v708
        %v735 = vpack.c.b16 %v728, %v727
        %v736 = vpack.c.b16 %v730, %v729
        %v737 = vpack.c.b16 %v732, %v731
        %v738 = vpack.c.b16 %v734, %v733
        %739 = vrot.lane.b32.xlu0 %v735, 112
        %v740 = vpop.permute.xlu0 %739
        %741 = vrot.lane.b32.xlu0 %v736, 112
        %v742 = vpop.permute.xlu0 %741
        %743 = vrot.lane.b32.xlu0 %v737, 112
        %v744 = vpop.permute.xlu0 %743
        %745 = vrot.lane.b32.xlu0 %v738, 112
        %v746 = vpop.permute.xlu0 %745
        %v752 = vsel %vm340, %v717, 0
        %v755 = vsel %vm340, %v718, 0
        %757 = vmatpush.bf16.msra.mxu0 0
        %758 = vmatpush.bf16.msra.mxu0 0
        %759 = vmatpush.bf16.msra.mxu0 0
        %760 = vmatpush.bf16.msra.mxu0 0
        %761 = vmatpush.bf16.msra.mxu0 %v746
        %762 = vmatpush.bf16.msra.mxu0 %v744
        %763 = vmatpush.bf16.msra.mxu0 %v742
        %764 = vmatpush.bf16.msra.mxu0 %v740
        %765 = vmatmul.bf16.gmra.mxu0 %v752
        %v766 = vpop.f32.mrf.mxu0
        %v767 = vadd.f32 0.0, %v766
        %v768 = vpop.f32.mrf.mxu0
        %v769 = vadd.f32 0.0, %v768
        %770 = vmatmul.bf16.gmra.mxu0 %v755
        %v771 = vpop.f32.mrf.mxu0
        %v772 = vadd.f32 0.0, %v771
        %v773 = vpop.f32.mrf.mxu0
        %v774 = vadd.f32 0.0, %v773
        %775 = vdwg.mxu0
        %780 = vrot.lane.b32.xlu0 %v767, 16
        %v781 = vpop.permute.xlu0 %780
        %782 = vrot.lane.b32.xlu0 %v769, 16
        %v783 = vpop.permute.xlu0 %782
        %784 = vrot.lane.b32.xlu0 %v772, 16
        %v785 = vpop.permute.xlu0 %784
        %786 = vrot.lane.b32.xlu0 %v774, 16
        %v787 = vpop.permute.xlu0 %786
        %vm792 = vcmask 261248
        %793 = vst.msk [vmem:[#allocation2] sm:$0xff] %vm792, %v781
        %794 = vst.msk [vmem:[#allocation2 + $0x8] sm:$0xff] %vm792, %v783
        %795 = vst.msk [vmem:[#allocation2 + $0x10] sm:$0xff] %vm792, %v785
        %796 = vst.msk [vmem:[#allocation2 + $0x18] sm:$0xff] %vm792, %v787
        %v797 = vld [vmem:[%s1 + $0x2] sm:$0x1]
        %v798 = vld [vmem:[%s247] sm:$0xff]
        %v799 = vld [vmem:[%s247 + $0x8] sm:$0xff]
        %v800 = vld [vmem:[%s247 + $0x10] sm:$0xff]
        %v801 = vld [vmem:[%s247 + $0x18] sm:$0xff]
        %803 = vset.pattern.permute.xlu0 2
        %804 = vperm.xlu0 %803, %v798
        %v805 = vpop.permute.xlu0 %804
        %808 = vset.pattern.permute.xlu0 2
        %809 = vperm.xlu0 %808, %v799
        %v810 = vpop.permute.xlu0 %809
        %813 = vset.pattern.permute.xlu0 2
        %814 = vperm.xlu0 %813, %v800
        %v815 = vpop.permute.xlu0 %814
        %818 = vset.pattern.permute.xlu0 2
        %819 = vperm.xlu0 %818, %v801
        %v820 = vpop.permute.xlu0 %819
        %v822 = vperm.slane %v797, 0
        %v823 = vadd.f32 %v805, %v822
        %v824 = vadd.f32 %v810, %v822
        %v825 = vadd.f32 %v815, %v822
        %v826 = vadd.f32 %v820, %v822
        %vm827 = vcmp.gt.f32.partialorder %v823, 0.0
        %vm828 = vcmp.gt.f32.partialorder %v824, 0.0
        %vm829 = vcmp.gt.f32.partialorder %v825, 0.0
        %vm830 = vcmp.gt.f32.partialorder %v826, 0.0
        %v831 = vmul.f32 %v823, 0.2
        %v832 = vmul.f32 %v824, 0.2
        %v833 = vmul.f32 %v825, 0.2
        %v834 = vmul.f32 %v826, 0.2
        %v835 = vsel %vm827, %v823, %v831
        %v836 = vsel %vm828, %v824, %v832
        %v837 = vsel %vm829, %v825, %v833
        %v838 = vsel %vm830, %v826, %v834
        %v839 = vsel %vm332, %v835, -1e+30
        %v840 = vsel %vm333, %v836, -1e+30
        %v841 = vsel %vm334, %v837, -1e+30
        %v842 = vsel %vm335, %v838, -1e+30
        %v843 = vsel %vm340, %v839, -inf
        %844 = vmax.xlane.f32.xlu0 %v843
        %v845 = vpop.xlane.xlu0 %844
        %v846 = vsel %vm340, %v840, -inf
        %847 = vmax.xlane.f32.xlu0 %v846
        %v848 = vpop.xlane.xlu0 %847
        %v849 = vsel %vm340, %v841, -inf
        %850 = vmax.xlane.f32.xlu0 %v849
        %v851 = vpop.xlane.xlu0 %850
        %v852 = vsel %vm340, %v842, -inf
        %853 = vmax.xlane.f32.xlu0 %v852
        %v854 = vpop.xlane.xlu0 %853
        %v855 = vmax.f32 %v845, -1e+29
        %v856 = vmax.f32 %v848, -1e+29
        %v857 = vmax.f32 %v851, -1e+29
        %v858 = vmax.f32 %v854, -1e+29
        %v859 = vsub.f32 %v839, %v855
        %v860 = vsub.f32 %v840, %v856
        %v861 = vsub.f32 %v841, %v857
        %v862 = vsub.f32 %v842, %v858
        %v863 = vmul.f32 %v859, 1.442695
        %v864 = vpow.pop %v863
        %v865 = vmul.f32 %v860, 1.442695
        %v866 = vpow.pop %v865
        %v867 = vmul.f32 %v861, 1.442695
        %v868 = vpow.pop %v867
        %v869 = vmul.f32 %v862, 1.442695
        %v870 = vpow.pop %v869
        %v871 = vsel %vm340, %v864, 0.0
        %872 = vadd.xlane.f32.xlu0 %v871
        %v873 = vpop.xlane.xlu0 %872
        %v874 = vsel %vm340, %v866, 0.0
        %875 = vadd.xlane.f32.xlu0 %v874
        %v876 = vpop.xlane.xlu0 %875
        %v877 = vsel %vm340, %v868, 0.0
        %878 = vadd.xlane.f32.xlu0 %v877
        %v879 = vpop.xlane.xlu0 %878
        %v880 = vsel %vm340, %v870, 0.0
        %881 = vadd.xlane.f32.xlu0 %v880
        %v882 = vpop.xlane.xlu0 %881
        %vm883 = vcmp.gt.f32.partialorder %v873, 0.0
        %vm884 = vcmp.gt.f32.partialorder %v876, 0.0
        %vm885 = vcmp.gt.f32.partialorder %v879, 0.0
        %vm886 = vcmp.gt.f32.partialorder %v882, 0.0
        %v887 = vsel %vm883, %v873, 1.0
        %v888 = vsel %vm884, %v876, 1.0
        %v889 = vsel %vm885, %v879, 1.0
        %v890 = vsel %vm886, %v882, 1.0
        %v891 = vrcp.pop %v887
        %v892 = vmul.f32 %v887, %v891
        %v893 = vsub.f32 1.0, %v892
        %v894 = vmul.f32 %v891, %v893
        %v895 = vadd.f32 %v891, %v894
        %vm896 = vweird.f32 %v887
        %vm897 = vweird.f32 %v891
        %vm898 = vmor %vm896, %vm897
        %v899 = vsel %vm898, %v891, %v895
        %v900 = vand.u32 2147483647, %v887
        %vm901 = vcmp.eq.f32.partialorder %v900, 8.507059e+37
        %v902 = vand.u32 %v887, 2147483648
        %v903 = vor.u32 1.1754944e-38, %v902
        %v904 = vsel %vm901, %v903, %v899
        %v905 = vmul.f32 1.0, %v904
        %v906 = vrcp.pop %v888
        %v907 = vmul.f32 %v888, %v906
        %v908 = vsub.f32 1.0, %v907
        %v909 = vmul.f32 %v906, %v908
        %v910 = vadd.f32 %v906, %v909
        %vm911 = vweird.f32 %v888
        %vm912 = vweird.f32 %v906
        %vm913 = vmor %vm911, %vm912
        %v914 = vsel %vm913, %v906, %v910
        %v915 = vand.u32 2147483647, %v888
        %vm916 = vcmp.eq.f32.partialorder %v915, 8.507059e+37
        %v917 = vand.u32 %v888, 2147483648
        %v918 = vor.u32 1.1754944e-38, %v917
        %v919 = vsel %vm916, %v918, %v914
        %v920 = vmul.f32 1.0, %v919
        %v921 = vrcp.pop %v889
        %v922 = vmul.f32 %v889, %v921
        %v923 = vsub.f32 1.0, %v922
        %v924 = vmul.f32 %v921, %v923
        %v925 = vadd.f32 %v921, %v924
        %vm926 = vweird.f32 %v889
        %vm927 = vweird.f32 %v921
        %vm928 = vmor %vm926, %vm927
        %v929 = vsel %vm928, %v921, %v925
        %v930 = vand.u32 2147483647, %v889
        %vm931 = vcmp.eq.f32.partialorder %v930, 8.507059e+37
        %v932 = vand.u32 %v889, 2147483648
        %v933 = vor.u32 1.1754944e-38, %v932
        %v934 = vsel %vm931, %v933, %v929
        %v935 = vmul.f32 1.0, %v934
        %v936 = vrcp.pop %v890
        %v937 = vmul.f32 %v890, %v936
        %v938 = vsub.f32 1.0, %v937
        %v939 = vmul.f32 %v936, %v938
        %v940 = vadd.f32 %v936, %v939
        %vm941 = vweird.f32 %v890
        %vm942 = vweird.f32 %v936
        %vm943 = vmor %vm941, %vm942
        %v944 = vsel %vm943, %v936, %v940
        %v945 = vand.u32 2147483647, %v890
        %vm946 = vcmp.eq.f32.partialorder %v945, 8.507059e+37
        %v947 = vand.u32 %v890, 2147483648
        %v948 = vor.u32 1.1754944e-38, %v947
        %v949 = vsel %vm946, %v948, %v944
        %v950 = vmul.f32 1.0, %v949
        %v951 = vmul.f32 %v864, %v905
        %v952 = vmul.f32 %v866, %v920
        %v953 = vmul.f32 %v868, %v935
        %v954 = vmul.f32 %v870, %v950
        %v955 = vpack.c.bf16 %v951, %v951
        %v956 = vpack.c.bf16 %v952, %v952
        %v957 = vpack.c.bf16 %v953, %v953
        %v958 = vpack.c.bf16 %v954, %v954
        %s959 = scalar_lea.vmem %s242, 32 [#allocation5]
        %960 = vst.msk [vmem:[%s959] sm:$0xf] %vm457, %v955
        %961 = vst.msk [vmem:[%s959 + $0x4] sm:$0xf] %vm457, %v956
        %962 = vst.msk [vmem:[%s959 + $0x8] sm:$0xf] %vm457, %v957
        %963 = vst.msk [vmem:[%s959 + $0xc] sm:$0xf] %vm457, %v958
        %v964 = vld [vmem:[%s0] sm:$0xf]
        %v965 = vld [vmem:[%s0 + $0x4] sm:$0xf]
        %v966 = vld [vmem:[%s0 + $0x8] sm:$0xf]
        %v967 = vld [vmem:[%s0 + $0xc] sm:$0xf]
        %v968 = vld [vmem:[%s0 + $0x10] sm:$0xf]
        %v969 = vld [vmem:[%s0 + $0x14] sm:$0xf]
        %v970 = vld [vmem:[%s0 + $0x18] sm:$0xf]
        %v971 = vld [vmem:[%s0 + $0x1c] sm:$0xf]
        %v976 = vunpack.c.l.b16 %v955
        %v977 = vunpack.c.l.b16 %v956
        %v978 = vunpack.c.l.b16 %v957
        %v979 = vunpack.c.l.b16 %v958
        %v980 = vpack.c.b16 %v977, %v976
        %v981 = vpack.c.b16 %v979, %v978
        %v990 = vunpack.c.l.b16 %v964
        %v991 = vunpack.c.l.b16 %v965
        %v992 = vunpack.c.l.b16 %v966
        %v993 = vunpack.c.l.b16 %v967
        %v994 = vunpack.c.l.b16 %v968
        %v995 = vunpack.c.l.b16 %v969
        %v996 = vunpack.c.l.b16 %v970
        %v997 = vunpack.c.l.b16 %v971
        %v998 = vpack.c.b16 %v991, %v990
        %v999 = vpack.c.b16 %v993, %v992
        %v1000 = vpack.c.b16 %v995, %v994
        %v1001 = vpack.c.b16 %v997, %v996
        %1002 = vrot.lane.b32.xlu0 %v998, 96
        %v1003 = vpop.permute.xlu0 %1002
        %1004 = vrot.lane.b32.xlu0 %v999, 96
        %v1005 = vpop.permute.xlu0 %1004
        %1006 = vrot.lane.b32.xlu0 %v1000, 96
        %v1007 = vpop.permute.xlu0 %1006
        %1008 = vrot.lane.b32.xlu0 %v1001, 96
        %v1009 = vpop.permute.xlu0 %1008
        %v1015 = vsel %vm340, %v980, 0
        %v1018 = vsel %vm340, %v981, 0
        %1020 = vmatpush.bf16.msra.mxu0 0
        %1021 = vmatpush.bf16.msra.mxu0 0
        %1022 = vmatpush.bf16.msra.mxu0 0
        %1023 = vmatpush.bf16.msra.mxu0 0
        %1024 = vmatpush.bf16.msra.mxu0 %v1009
        %1025 = vmatpush.bf16.msra.mxu0 %v1007
        %1026 = vmatpush.bf16.msra.mxu0 %v1005
        %1027 = vmatpush.bf16.msra.mxu0 %v1003
        %1028 = vmatmul.bf16.gmra.mxu0 %v1015
        %v1029 = vpop.f32.mrf.mxu0
        %v1030 = vadd.f32 0.0, %v1029
        %v1031 = vpop.f32.mrf.mxu0
        %v1032 = vadd.f32 0.0, %v1031
        %1033 = vmatmul.bf16.gmra.mxu0 %v1018
        %v1034 = vpop.f32.mrf.mxu0
        %v1035 = vadd.f32 0.0, %v1034
        %v1036 = vpop.f32.mrf.mxu0
        %v1037 = vadd.f32 0.0, %v1036
        %1038 = vdwg.mxu0
        %1043 = vrot.lane.b32.xlu0 %v1030, 32
        %v1044 = vpop.permute.xlu0 %1043
        %1045 = vrot.lane.b32.xlu0 %v1032, 32
        %v1046 = vpop.permute.xlu0 %1045
        %1047 = vrot.lane.b32.xlu0 %v1035, 32
        %v1048 = vpop.permute.xlu0 %1047
        %1049 = vrot.lane.b32.xlu0 %v1037, 32
        %v1050 = vpop.permute.xlu0 %1049
        %vm1055 = vcmask 392448
        %1056 = vst.msk [vmem:[#allocation2] sm:$0xff] %vm1055, %v1044
        %1057 = vst.msk [vmem:[#allocation2 + $0x8] sm:$0xff] %vm1055, %v1046
        %1058 = vst.msk [vmem:[#allocation2 + $0x10] sm:$0xff] %vm1055, %v1048
        %1059 = vst.msk [vmem:[#allocation2 + $0x18] sm:$0xff] %vm1055, %v1050
        %v1060 = vld [vmem:[%s1 + $0x3] sm:$0x1]
        %v1061 = vld [vmem:[%s247] sm:$0xff]
        %v1062 = vld [vmem:[%s247 + $0x8] sm:$0xff]
        %v1063 = vld [vmem:[%s247 + $0x10] sm:$0xff]
        %v1064 = vld [vmem:[%s247 + $0x18] sm:$0xff]
        %1066 = vset.pattern.permute.xlu0 3
        %1067 = vperm.xlu0 %1066, %v1061
        %v1068 = vpop.permute.xlu0 %1067
        %1071 = vset.pattern.permute.xlu0 3
        %1072 = vperm.xlu0 %1071, %v1062
        %v1073 = vpop.permute.xlu0 %1072
        %1076 = vset.pattern.permute.xlu0 3
        %1077 = vperm.xlu0 %1076, %v1063
        %v1078 = vpop.permute.xlu0 %1077
        %1081 = vset.pattern.permute.xlu0 3
        %1082 = vperm.xlu0 %1081, %v1064
        %v1083 = vpop.permute.xlu0 %1082
        %v1085 = vperm.slane %v1060, 0
        %v1086 = vadd.f32 %v1068, %v1085
        %v1087 = vadd.f32 %v1073, %v1085
        %v1088 = vadd.f32 %v1078, %v1085
        %v1089 = vadd.f32 %v1083, %v1085
        %vm1090 = vcmp.gt.f32.partialorder %v1086, 0.0
        %vm1091 = vcmp.gt.f32.partialorder %v1087, 0.0
        %vm1092 = vcmp.gt.f32.partialorder %v1088, 0.0
        %vm1093 = vcmp.gt.f32.partialorder %v1089, 0.0
        %v1094 = vmul.f32 %v1086, 0.2
        %v1095 = vmul.f32 %v1087, 0.2
        %v1096 = vmul.f32 %v1088, 0.2
        %v1097 = vmul.f32 %v1089, 0.2
        %v1098 = vsel %vm1090, %v1086, %v1094
        %v1099 = vsel %vm1091, %v1087, %v1095
        %v1100 = vsel %vm1092, %v1088, %v1096
        %v1101 = vsel %vm1093, %v1089, %v1097
        %v1102 = vsel %vm332, %v1098, -1e+30
        %v1103 = vsel %vm333, %v1099, -1e+30
        %v1104 = vsel %vm334, %v1100, -1e+30
        %v1105 = vsel %vm335, %v1101, -1e+30
        %v1106 = vsel %vm340, %v1102, -inf
        %1107 = vmax.xlane.f32.xlu0 %v1106
        %v1108 = vpop.xlane.xlu0 %1107
        %v1109 = vsel %vm340, %v1103, -inf
        %1110 = vmax.xlane.f32.xlu0 %v1109
        %v1111 = vpop.xlane.xlu0 %1110
        %v1112 = vsel %vm340, %v1104, -inf
        %1113 = vmax.xlane.f32.xlu0 %v1112
        %v1114 = vpop.xlane.xlu0 %1113
        %v1115 = vsel %vm340, %v1105, -inf
        %1116 = vmax.xlane.f32.xlu0 %v1115
        %v1117 = vpop.xlane.xlu0 %1116
        %v1118 = vmax.f32 %v1108, -1e+29
        %v1119 = vmax.f32 %v1111, -1e+29
        %v1120 = vmax.f32 %v1114, -1e+29
        %v1121 = vmax.f32 %v1117, -1e+29
        %v1122 = vsub.f32 %v1102, %v1118
        %v1123 = vsub.f32 %v1103, %v1119
        %v1124 = vsub.f32 %v1104, %v1120
        %v1125 = vsub.f32 %v1105, %v1121
        %v1126 = vmul.f32 %v1122, 1.442695
        %v1127 = vpow.pop %v1126
        %v1128 = vmul.f32 %v1123, 1.442695
        %v1129 = vpow.pop %v1128
        %v1130 = vmul.f32 %v1124, 1.442695
        %v1131 = vpow.pop %v1130
        %v1132 = vmul.f32 %v1125, 1.442695
        %v1133 = vpow.pop %v1132
        %v1134 = vsel %vm340, %v1127, 0.0
        %1135 = vadd.xlane.f32.xlu0 %v1134
        %v1136 = vpop.xlane.xlu0 %1135
        %v1137 = vsel %vm340, %v1129, 0.0
        %1138 = vadd.xlane.f32.xlu0 %v1137
        %v1139 = vpop.xlane.xlu0 %1138
        %v1140 = vsel %vm340, %v1131, 0.0
        %1141 = vadd.xlane.f32.xlu0 %v1140
        %v1142 = vpop.xlane.xlu0 %1141
        %v1143 = vsel %vm340, %v1133, 0.0
        %1144 = vadd.xlane.f32.xlu0 %v1143
        %v1145 = vpop.xlane.xlu0 %1144
        %vm1146 = vcmp.gt.f32.partialorder %v1136, 0.0
        %vm1147 = vcmp.gt.f32.partialorder %v1139, 0.0
        %vm1148 = vcmp.gt.f32.partialorder %v1142, 0.0
        %vm1149 = vcmp.gt.f32.partialorder %v1145, 0.0
        %v1150 = vsel %vm1146, %v1136, 1.0
        %v1151 = vsel %vm1147, %v1139, 1.0
        %v1152 = vsel %vm1148, %v1142, 1.0
        %v1153 = vsel %vm1149, %v1145, 1.0
        %v1154 = vrcp.pop %v1150
        %v1155 = vmul.f32 %v1150, %v1154
        %v1156 = vsub.f32 1.0, %v1155
        %v1157 = vmul.f32 %v1154, %v1156
        %v1158 = vadd.f32 %v1154, %v1157
        %vm1159 = vweird.f32 %v1150
        %vm1160 = vweird.f32 %v1154
        %vm1161 = vmor %vm1159, %vm1160
        %v1162 = vsel %vm1161, %v1154, %v1158
        %v1163 = vand.u32 2147483647, %v1150
        %vm1164 = vcmp.eq.f32.partialorder %v1163, 8.507059e+37
        %v1165 = vand.u32 %v1150, 2147483648
        %v1166 = vor.u32 1.1754944e-38, %v1165
        %v1167 = vsel %vm1164, %v1166, %v1162
        %v1168 = vmul.f32 1.0, %v1167
        %v1169 = vrcp.pop %v1151
        %v1170 = vmul.f32 %v1151, %v1169
        %v1171 = vsub.f32 1.0, %v1170
        %v1172 = vmul.f32 %v1169, %v1171
        %v1173 = vadd.f32 %v1169, %v1172
        %vm1174 = vweird.f32 %v1151
        %vm1175 = vweird.f32 %v1169
        %vm1176 = vmor %vm1174, %vm1175
        %v1177 = vsel %vm1176, %v1169, %v1173
        %v1178 = vand.u32 2147483647, %v1151
        %vm1179 = vcmp.eq.f32.partialorder %v1178, 8.507059e+37
        %v1180 = vand.u32 %v1151, 2147483648
        %v1181 = vor.u32 1.1754944e-38, %v1180
        %v1182 = vsel %vm1179, %v1181, %v1177
        %v1183 = vmul.f32 1.0, %v1182
        %v1184 = vrcp.pop %v1152
        %v1185 = vmul.f32 %v1152, %v1184
        %v1186 = vsub.f32 1.0, %v1185
        %v1187 = vmul.f32 %v1184, %v1186
        %v1188 = vadd.f32 %v1184, %v1187
        %vm1189 = vweird.f32 %v1152
        %vm1190 = vweird.f32 %v1184
        %vm1191 = vmor %vm1189, %vm1190
        %v1192 = vsel %vm1191, %v1184, %v1188
        %v1193 = vand.u32 2147483647, %v1152
        %vm1194 = vcmp.eq.f32.partialorder %v1193, 8.507059e+37
        %v1195 = vand.u32 %v1152, 2147483648
        %v1196 = vor.u32 1.1754944e-38, %v1195
        %v1197 = vsel %vm1194, %v1196, %v1192
        %v1198 = vmul.f32 1.0, %v1197
        %v1199 = vrcp.pop %v1153
        %v1200 = vmul.f32 %v1153, %v1199
        %v1201 = vsub.f32 1.0, %v1200
        %v1202 = vmul.f32 %v1199, %v1201
        %v1203 = vadd.f32 %v1199, %v1202
        %vm1204 = vweird.f32 %v1153
        %vm1205 = vweird.f32 %v1199
        %vm1206 = vmor %vm1204, %vm1205
        %v1207 = vsel %vm1206, %v1199, %v1203
        %v1208 = vand.u32 2147483647, %v1153
        %vm1209 = vcmp.eq.f32.partialorder %v1208, 8.507059e+37
        %v1210 = vand.u32 %v1153, 2147483648
        %v1211 = vor.u32 1.1754944e-38, %v1210
        %v1212 = vsel %vm1209, %v1211, %v1207
        %v1213 = vmul.f32 1.0, %v1212
        %v1214 = vmul.f32 %v1127, %v1168
        %v1215 = vmul.f32 %v1129, %v1183
        %v1216 = vmul.f32 %v1131, %v1198
        %v1217 = vmul.f32 %v1133, %v1213
        %v1218 = vpack.c.bf16 %v1214, %v1214
        %v1219 = vpack.c.bf16 %v1215, %v1215
        %v1220 = vpack.c.bf16 %v1216, %v1216
        %v1221 = vpack.c.bf16 %v1217, %v1217
        %s1222 = scalar_lea.vmem %s242, 48 [#allocation5]
        %1223 = vst.msk [vmem:[%s1222] sm:$0xf] %vm457, %v1218
        %1224 = vst.msk [vmem:[%s1222 + $0x4] sm:$0xf] %vm457, %v1219
        %1225 = vst.msk [vmem:[%s1222 + $0x8] sm:$0xf] %vm457, %v1220
        %1226 = vst.msk [vmem:[%s1222 + $0xc] sm:$0xf] %vm457, %v1221
        %v1227 = vld [vmem:[%s0] sm:$0xf]
        %v1228 = vld [vmem:[%s0 + $0x4] sm:$0xf]
        %v1229 = vld [vmem:[%s0 + $0x8] sm:$0xf]
        %v1230 = vld [vmem:[%s0 + $0xc] sm:$0xf]
        %v1231 = vld [vmem:[%s0 + $0x10] sm:$0xf]
        %v1232 = vld [vmem:[%s0 + $0x14] sm:$0xf]
        %v1233 = vld [vmem:[%s0 + $0x18] sm:$0xf]
        %v1234 = vld [vmem:[%s0 + $0x1c] sm:$0xf]
        %v1239 = vunpack.c.l.b16 %v1218
        %v1240 = vunpack.c.l.b16 %v1219
        %v1241 = vunpack.c.l.b16 %v1220
        %v1242 = vunpack.c.l.b16 %v1221
        %v1243 = vpack.c.b16 %v1240, %v1239
        %v1244 = vpack.c.b16 %v1242, %v1241
        %v1253 = vunpack.c.l.b16 %v1227
        %v1254 = vunpack.c.l.b16 %v1228
        %v1255 = vunpack.c.l.b16 %v1229
        %v1256 = vunpack.c.l.b16 %v1230
        %v1257 = vunpack.c.l.b16 %v1231
        %v1258 = vunpack.c.l.b16 %v1232
        %v1259 = vunpack.c.l.b16 %v1233
        %v1260 = vunpack.c.l.b16 %v1234
        %v1261 = vpack.c.b16 %v1254, %v1253
        %v1262 = vpack.c.b16 %v1256, %v1255
        %v1263 = vpack.c.b16 %v1258, %v1257
        %v1264 = vpack.c.b16 %v1260, %v1259
        %1265 = vrot.lane.b32.xlu0 %v1261, 80
        %v1266 = vpop.permute.xlu0 %1265
        %1267 = vrot.lane.b32.xlu0 %v1262, 80
        %v1268 = vpop.permute.xlu0 %1267
        %1269 = vrot.lane.b32.xlu0 %v1263, 80
        %v1270 = vpop.permute.xlu0 %1269
        %1271 = vrot.lane.b32.xlu0 %v1264, 80
        %v1272 = vpop.permute.xlu0 %1271
        %v1278 = vsel %vm340, %v1243, 0
        %v1281 = vsel %vm340, %v1244, 0
        %1283 = vmatpush.bf16.msra.mxu0 0
        %1284 = vmatpush.bf16.msra.mxu0 0
        %1285 = vmatpush.bf16.msra.mxu0 0
        %1286 = vmatpush.bf16.msra.mxu0 0
        %1287 = vmatpush.bf16.msra.mxu0 %v1272
        %1288 = vmatpush.bf16.msra.mxu0 %v1270
        %1289 = vmatpush.bf16.msra.mxu0 %v1268
        %1290 = vmatpush.bf16.msra.mxu0 %v1266
        %1291 = vmatmul.bf16.gmra.mxu0 %v1278
        %v1292 = vpop.f32.mrf.mxu0
        %v1293 = vadd.f32 0.0, %v1292
        %v1294 = vpop.f32.mrf.mxu0
        %v1295 = vadd.f32 0.0, %v1294
        %1296 = vmatmul.bf16.gmra.mxu0 %v1281
        %v1297 = vpop.f32.mrf.mxu0
        %v1298 = vadd.f32 0.0, %v1297
        %v1299 = vpop.f32.mrf.mxu0
        %v1300 = vadd.f32 0.0, %v1299
        %1301 = vdwg.mxu0
        %1306 = vrot.lane.b32.xlu0 %v1293, 48
        %v1307 = vpop.permute.xlu0 %1306
        %1308 = vrot.lane.b32.xlu0 %v1295, 48
        %v1309 = vpop.permute.xlu0 %1308
        %1310 = vrot.lane.b32.xlu0 %v1298, 48
        %v1311 = vpop.permute.xlu0 %1310
        %1312 = vrot.lane.b32.xlu0 %v1300, 48
        %v1313 = vpop.permute.xlu0 %1312
        %vm1318 = vcmask 523648
        %1319 = vst.msk [vmem:[#allocation2] sm:$0xff] %vm1318, %v1307
        %1320 = vst.msk [vmem:[#allocation2 + $0x8] sm:$0xff] %vm1318, %v1309
        %1321 = vst.msk [vmem:[#allocation2 + $0x10] sm:$0xff] %vm1318, %v1311
        %1322 = vst.msk [vmem:[#allocation2 + $0x18] sm:$0xff] %vm1318, %v1313
        %v1323 = vld [vmem:[#allocation2] sm:$0xff]
        %v1324 = vld [vmem:[#allocation2 + $0x8] sm:$0xff]
        %v1325 = vld [vmem:[#allocation2 + $0x10] sm:$0xff]
        %v1326 = vld [vmem:[#allocation2 + $0x18] sm:$0xff]
        %1327 = vst [vmem:[%s235] sm:$0xff] %v1323
        %1328 = vst [vmem:[%s235 + $0x8] sm:$0xff] %v1324
        %1329 = vst [vmem:[%s235 + $0x10] sm:$0xff] %v1325
        %1330 = vst [vmem:[%s235 + $0x18] sm:$0xff] %v1326
        %s1331 = sand.u32 %s125, 1
        %s1332 = scalar_lea.sflag [#allocation4], %s1331
        %s1333 = sand.u32 %s125, 1
        %s1334 = smul.addr %s1333, 32
        %s1335 = scalar_lea.vmem [#allocation3], %s1334
        %s1336 = sand.u32 %s151, 1
        %s1337 = scalar_lea.sflag [#allocation6], %s1336
        %s1338 = sand.u32 %s151, 1
        %s1339 = smul.addr %s1338, 64
        %s1340 = scalar_lea.vmem [#allocation5], %s1339
        // Predicated region
        $region37: #{tpu_custom_call.1} parent=35 // pred_check
          %p1341 = pneg %p135
        $region38: #{tpu_custom_call.1} parent=35 // pred_check_branch
          %1343 = sbr.rel (%p1341) target = $region40
        $region39: #{tpu_custom_call.1} parent=35 // pred_region
          %s1344 = smul.u32 4, %s23
          %1346 = vsyncadd %s1332, 0
          %s1347 = smul.addr %s1344, 8
          %s1348 = scalar_lea.hbm %s4, %s1347
          %s1349 = sshll.u32 %s1335, 4
          %s1350 = int_to_ptr.vmem [resolvable:$true] %s1349
          %s1351 = sshll.u32 %s1348, 4
          %s1352 = int_to_ptr.hbm [resolvable:$true] %s1351
          %1357 = dma.vmem_to_hbm [thread:$0]  %s1350, 512, %s1352, %s1332, 128, 128, 8
        $region40: #{tpu_custom_call.1} parent=35 // pred_fallthru
          _
        // Predicated region
        $region41: #{tpu_custom_call.1} parent=35 // pred_check
          %p1358 = pneg %p161
        $region42: #{tpu_custom_call.1} parent=35 // pred_check_branch
          %1360 = sbr.rel (%p1358) target = $region44
        $region43: #{tpu_custom_call.1} parent=35 // pred_region
          #allocation8 [shape = 'u32[6]{0}', space=smem, size = 0x18, scoped, tag = 'DMA stride descriptor']
          %s1361 = smul.u32 4, %s23
          %1363 = vsyncadd %s1337, 0
          %s1364 = smul.addr %s1361, 4
          %s1365 = scalar_lea.hbm %s5, %s1364
          %s1367 = sshll.u32 1, 14
          %s1368 = sxor.u32 4294967295, %s1367
          %s1371 = sshll.u32 7, 18
          %s1372 = sxor.u32 4294967295, %s1371
          %s1373 = sand.u32 0, %s1372
          %s1375 = sor.u32 %s1373, 0
          %s1376 = sshll.u32 %s1340, 4
          %s1377 = int_to_ptr.vmem [resolvable:$true] %s1376
          %s1378 = sshll.u32 %s1365, 4
          %s1379 = int_to_ptr.hbm [resolvable:$true] %s1378
          %1385 = sst [smem:[#allocation8]] 256
          %s1386 = scalar_lea.smem [#allocation8], 1
          %1387 = sst [smem:[%s1386]] 512
          %s1388 = scalar_lea.smem [#allocation8], 2
          %1389 = sst [smem:[%s1388]] 4
          %s1390 = scalar_lea.smem [#allocation8], 3
          %1391 = sst [smem:[%s1390]] 64
          %s1392 = scalar_lea.smem [#allocation8], 4
          %1393 = sst [smem:[%s1392]] 64
          %s1394 = scalar_lea.smem [#allocation8], 5
          %1395 = sst [smem:[%s1394]] 4
          %1397 = dma.general %s1377, 1024, %s1379, %s1337, [#allocation7], [#allocation8], %s1375, 0
        $region44: #{tpu_custom_call.1} parent=35 // pred_fallthru
          _
      $region36: #{tpu_custom_call.1} parent=5 // pred_fallthru
        _
      %p1398 = scmp.le.s32.totalorder 2, %s18
      // Predicated region
      $region45: #{tpu_custom_call.1} parent=5 // pred_check
        %p1399 = pneg %p1398
      $region46: #{tpu_custom_call.1} parent=5 // pred_check_branch
        %1401 = sbr.rel (%p1399) target = $region48
      $region47: #{tpu_custom_call.1} parent=5 // pred_region
        %s1402 = ssub.s32 %s18, 2
        // Predicated region
        $region49: #{tpu_custom_call.1} parent=47 // pred_check
          %p1403 = pneg %p141
        $region50: #{tpu_custom_call.1} parent=47 // pred_check_branch
          %1405 = sbr.rel (%p1403) target = $region52
        $region51: #{tpu_custom_call.1} parent=47 // pred_region
          %s1406 = sand.u32 %s126, 1
          %s1407 = scalar_lea.sflag [#allocation4], %s1406
          %s1408 = sand.u32 %s126, 1
          %s1409 = smul.addr %s1408, 32
          %s1410 = scalar_lea.vmem [#allocation3], %s1409
          %1412 = dma.done %s1407, 512
        $region52: #{tpu_custom_call.1} parent=47 // pred_fallthru
          _
        // Predicated region
        $region53: #{tpu_custom_call.1} parent=47 // pred_check
          %p1413 = pneg %p167
        $region54: #{tpu_custom_call.1} parent=47 // pred_check_branch
          %1415 = sbr.rel (%p1413) target = $region56
        $region55: #{tpu_custom_call.1} parent=47 // pred_region
          %s1416 = sand.u32 %s152, 1
          %s1417 = scalar_lea.sflag [#allocation6], %s1416
          %s1418 = sand.u32 %s152, 1
          %s1419 = smul.addr %s1418, 64
          %s1420 = scalar_lea.vmem [#allocation5], %s1419
          %1422 = dma.done %s1417, 1024
        $region56: #{tpu_custom_call.1} parent=47 // pred_fallthru
          _
      $region48: #{tpu_custom_call.1} parent=5 // pred_fallthru
        _
    $region6: #{tpu_custom_call.1} parent=1 // loop_footer
      %s22 = sadd.s32 1, %s18
    $region7: #{tpu_custom_call.1} parent=1 // loop_footer_branch
      %17 = sbr.rel target = $region3
    $region8: #{tpu_custom_call.1} parent=1 // loop_exit
      _
    %1423 = vsyncpa [#allocation4], 1
    %s1424 = scalar_lea.sflag [#allocation4], 1
    %1425 = vsyncpa %s1424, 1
    %1426 = vsyncpa [#allocation6], 1
    %s1427 = scalar_lea.sflag [#allocation6], 1
    %1428 = vsyncpa %s1427, 1

</llo_original>
